<compile_context>
chip_gen: v7x
topology: tpu7x:2x2x1
jax: 0.10.0
libtpu: 0.0.40
codegen_flags: <defaults>
</compile_context>

<pallas_src>
import functools

import jax
import jax.numpy as jnp
from jax.experimental import pallas as pl
from jax.experimental.pallas import tpu as pltpu


def _attention_kernel(xq_ref, xkv_ref, wq_ref, wk_ref, wv_ref, wm_ref, bm_ref,
                      out_ref, *, tb, seq_l, seq_s, dim, num_heads, head_dim,
                      softmax_temp):
    f32 = jnp.float32
    bf16 = jnp.bfloat16

    # Flatten once per batch block so projections are tall 2-D MXU matmuls.
    # (Layout-preserving when L/S are multiples of 8; otherwise a single
    # in-VMEM relayout per block.)
    xq = xq_ref[...].reshape(tb * seq_l, dim).astype(bf16)     # (TB*L, C)
    xkv = xkv_ref[...].reshape(tb * seq_s, dim).astype(bf16)   # (TB*S, C)

    # Fused full-width projections, bf16 operands, f32 accumulation.
    q = jnp.dot(xq, wq_ref[...], preferred_element_type=f32)    # (TB*L, C)
    k = jnp.dot(xkv, wk_ref[...], preferred_element_type=f32)   # (TB*S, C)
    v = jnp.dot(xkv, wv_ref[...], preferred_element_type=f32)   # (TB*S, C)

    q = q.reshape(tb, seq_l, dim).astype(bf16)
    k = k.reshape(tb, seq_s, dim).astype(bf16)
    v = v.reshape(tb, seq_s, dim).astype(bf16)

    # Per-head scaled-dot-product attention. Static unrolled loop over heads;
    # every einsum has a single leading batch dim (TB), which lowers cleanly.
    ctx_heads = []
    for h in range(num_heads):
        lo = h * head_dim
        qh = q[:, :, lo:lo + head_dim]                          # (TB, L, Dh)
        kh = k[:, :, lo:lo + head_dim]                          # (TB, S, Dh)
        vh = v[:, :, lo:lo + head_dim]                          # (TB, S, Dh)

        s = jnp.einsum('bld,bsd->bls', qh, kh,
                       preferred_element_type=f32) * softmax_temp
        s = s - jnp.max(s, axis=-1, keepdims=True)
        p = jnp.exp(s)
        p = p * pl.reciprocal(jnp.sum(p, axis=-1, keepdims=True), approx=True)

        ctx_heads.append(
            jnp.einsum('bls,bsd->bld', p.astype(bf16), vh,
                       preferred_element_type=f32))             # (TB, L, Dh)

    # Concatenate heads along channels (matches torch's transpose+reshape
    # ordering: channel = h*Dh + dh), then ONE full-width merge matmul.
    ctx = jnp.concatenate(ctx_heads, axis=-1)                   # (TB, L, C)
    ctx = ctx.reshape(tb * seq_l, dim).astype(bf16)

    out = jnp.dot(ctx, wm_ref[...], preferred_element_type=f32) + bm_ref[...]
    out_ref[...] = out.reshape(tb, seq_l, dim).astype(out_ref.dtype)


def _pick_batch_block(n, rows, target_rows=512):
    """Largest divisor of n with block*rows near target_rows.

    Capped at n//2 (when n >= 2) so the 'parallel' batch grid axis always has
    at least two iterations — required to keep both v7x TensorCores busy.
    """
    want = max(1, target_rows // max(rows, 1))
    tb = min(n, want)
    if n >= 2:
        tb = min(tb, max(1, n // 2))
    while n % tb:
        tb -= 1
    return tb


def vanilla_attention(x_q, x_kv=None, *, wq, wkv, wm, bm, num_heads):
    """x_q: [N, L, C], x_kv: [N, S, C] (or None -> x_q). Returns [N, L, C].

    Weights follow the PyTorch nn.Linear convention (W: [out, in]); they are
    re-laid-out ([in, out]) and cast to bf16 host-side before entering the
    kernel.
    """
    if x_kv is None:
        x_kv = x_q
    N, L, C = x_q.shape
    _, S, _ = x_kv.shape
    H = num_heads
    assert C % H == 0, "dim must be divisible by num_heads"
    Dh = C // H
    softmax_temp = Dh ** (-0.5)

    # ---- Host-side (free) weight re-layout: [in, out], fused K/V split, bf16.
    wq_t = jnp.swapaxes(wq, 0, 1).astype(jnp.bfloat16)           # (C, C)
    wkv_t = jnp.swapaxes(wkv, 0, 1)                              # (C, 2C)
    wk_t = wkv_t[:, :C].astype(jnp.bfloat16)                     # (C, C)
    wv_t = wkv_t[:, C:].astype(jnp.bfloat16)                     # (C, C)
    wm_t = jnp.swapaxes(wm, 0, 1).astype(jnp.bfloat16)           # (C, C)
    bm2 = bm.reshape(1, C).astype(jnp.float32)                   # (1, C)

    TB = _pick_batch_block(N, max(L, S))
    grid = (N // TB,)

    kernel = functools.partial(
        _attention_kernel, tb=TB, seq_l=L, seq_s=S, dim=C, num_heads=H,
        head_dim=Dh, softmax_temp=softmax_temp)

    cost = pl.CostEstimate(
        flops=int(2 * N * L * C * C            # q projection
                  + 2 * N * S * C * 2 * C      # k + v projections
                  + 4 * N * H * L * S * Dh     # q@k^T and p@v
                  + 2 * N * L * C * C),        # merge projection
        transcendentals=int(N * H * L * S),
        bytes_accessed=int(x_q.size * x_q.dtype.itemsize
                           + x_kv.size * x_kv.dtype.itemsize
                           + 4 * C * C * 2 + C * 4          # bf16 weights + bias
                           + N * L * C * x_q.dtype.itemsize),
    )

    # ---- Explicit VMEM budget (matters on v7x: 64 MiB physical / 32 default).
    fbytes = 4
    in_bytes = 2 * (TB * L * C + TB * S * C) * fbytes        # double-buffered
    out_bytes = 2 * TB * L * C * fbytes                      # double-buffered
    w_bytes = 4 * C * C * 2 + C * fbytes                     # resident bf16
    interm = (3 * TB * max(L, S) * C                         # q, k, v (f32)
              + 2 * TB * H * L * S                           # scores, p
              + 2 * TB * L * C) * fbytes                     # ctx, merge out
    est = in_bytes + out_bytes + w_bytes + 2 * interm
    vmem_limit = None
    if est > (24 << 20):
        vmem_limit = int(min(max(2 * est, 32 << 20), 48 << 20))

    return pl.pallas_call(
        kernel,
        out_shape=jax.ShapeDtypeStruct((N, L, C), x_q.dtype),
        grid_spec=pltpu.PrefetchScalarGridSpec(
            num_scalar_prefetch=0,
            grid=grid,
            in_specs=[
                pl.BlockSpec((TB, L, C), lambda b: (b, 0, 0)),   # x_q
                pl.BlockSpec((TB, S, C), lambda b: (b, 0, 0)),   # x_kv
                pl.BlockSpec((C, C), lambda b: (0, 0)),          # Wq  (resident)
                pl.BlockSpec((C, C), lambda b: (0, 0)),          # Wk  (resident)
                pl.BlockSpec((C, C), lambda b: (0, 0)),          # Wv  (resident)
                pl.BlockSpec((C, C), lambda b: (0, 0)),          # Wm  (resident)
                pl.BlockSpec((1, C), lambda b: (0, 0)),          # merge bias
            ],
            out_specs=pl.BlockSpec((TB, L, C), lambda b: (b, 0, 0)),
        ),
        compiler_params=pltpu.CompilerParams(
            dimension_semantics=("parallel",),
            vmem_limit_bytes=vmem_limit),
        cost_estimate=cost,
    )(x_q, x_kv, wq_t, wk_t, wv_t, wm_t, bm2)


def _reference(x_q, x_kv, wq, wkv, wm, bm, *, num_heads):
    """Pure-JAX f32 reference mirroring the PyTorch forward exactly."""
    N, L, C = x_q.shape
    S = x_kv.shape[1]
    Dh = C // num_heads
    temp = Dh ** (-0.5)

    kv = (x_kv @ wkv.T).reshape(N, S, 2, num_heads, Dh).transpose(2, 0, 3, 1, 4)
    q = (x_q @ wq.T).reshape(N, L, num_heads, Dh).transpose(0, 2, 1, 3)
    k = jnp.swapaxes(kv[0], -2, -1)
    v = kv[1]
    attn = jax.nn.softmax(q @ k * temp, axis=-1)
    out = (attn @ v).transpose(0, 2, 1, 3).reshape(N, L, C)
    return out @ wm.T + bm


if __name__ == "__main__":
    # Small shapes consistent with the module: dim divisible by num_heads.
    N, L, S, C = 2, 8, 8, 32
    num_heads = 8

    key = jax.random.PRNGKey(0)
    k1, k2, k3, k4, k5, k6 = jax.random.split(key, 6)

    x_q = jax.random.normal(k1, (N, L, C), dtype=jnp.float32)
    x_kv = jax.random.normal(k2, (N, S, C), dtype=jnp.float32)

    # Deterministic parameter init (synthetic; no checkpoint loading).
    wq = 0.05 * jax.random.normal(k3, (C, C), dtype=jnp.float32)        # q_proj.weight
    wkv = 0.05 * jax.random.normal(k4, (2 * C, C), dtype=jnp.float32)   # kv_proj.weight
    wm = 0.05 * jax.random.normal(k5, (C, C), dtype=jnp.float32)        # merge.weight
    bm = 0.05 * jax.random.normal(k6, (C,), dtype=jnp.float32)          # merge.bias

    out = vanilla_attention(x_q, x_kv, wq=wq, wkv=wkv, wm=wm, bm=bm,
                            num_heads=num_heads)
    out = jax.block_until_ready(out)

    ref = _reference(x_q, x_kv, wq, wkv, wm, bm, num_heads=num_heads)
    assert out.shape == (N, L, C)
    # Tolerance accounts for bf16 MXU operands (f32 accumulation) and the EUP
    # approximate reciprocal in the softmax denominator; measured error is
    # ~1e-3 absolute on these shapes.
    assert jnp.allclose(out, ref, atol=1e-2, rtol=1e-2), "mismatch vs reference"

    print("KERNEL_OK")
</pallas_src>

<mosaic_0001>
module attributes {stable_mosaic.version = 11 : i64} {
  func.func @_attention_kernel(%arg0: i32, %arg1: memref<1x8x32xf32, #tpu.memory_space<vmem>>, %arg2: memref<1x8x32xf32, #tpu.memory_space<vmem>>, %arg3: memref<32x32xbf16, #tpu.memory_space<vmem>>, %arg4: memref<32x32xbf16, #tpu.memory_space<vmem>>, %arg5: memref<32x32xbf16, #tpu.memory_space<vmem>>, %arg6: memref<32x32xbf16, #tpu.memory_space<vmem>>, %arg7: memref<1x32xf32, #tpu.memory_space<vmem>>, %arg8: memref<1x8x32xf32, #tpu.memory_space<vmem>>) attributes {dimension_semantics = [#tpu.dimension_semantics<parallel>], iteration_bounds = array<i64: 2>, scalar_prefetch = 0 : i64, scratch_operands = 0 : i64, tpu.core_type = #tpu.core_type<tc>, window_params = [{transform_indices = @transform_0, window_bounds = array<i64: 1, 8, 32>}, {transform_indices = @transform_1, window_bounds = array<i64: 1, 8, 32>}, {pipeline_mode = #tpu.pipeline_mode<synchronous>, transform_indices = @transform_2, window_bounds = array<i64: 32, 32>}, {pipeline_mode = #tpu.pipeline_mode<synchronous>, transform_indices = @transform_3, window_bounds = array<i64: 32, 32>}, {pipeline_mode = #tpu.pipeline_mode<synchronous>, transform_indices = @transform_4, window_bounds = array<i64: 32, 32>}, {pipeline_mode = #tpu.pipeline_mode<synchronous>, transform_indices = @transform_5, window_bounds = array<i64: 32, 32>}, {pipeline_mode = #tpu.pipeline_mode<synchronous>, transform_indices = @transform_6, window_bounds = array<i64: 1, 32>}, {transform_indices = @transform_7, window_bounds = array<i64: 1, 8, 32>}]} {
    %c0 = arith.constant 0 : index
    %c0_0 = arith.constant 0 : index
    %c0_1 = arith.constant 0 : index
    %0 = vector.load %arg1[%c0, %c0_0, %c0_1] : memref<1x8x32xf32, #tpu.memory_space<vmem>>, vector<1x8x32xf32>
    %1 = vector.shape_cast %0 : vector<1x8x32xf32> to vector<8x32xf32>
    %2 = arith.truncf %1 : vector<8x32xf32> to vector<8x32xbf16>
    %c0_2 = arith.constant 0 : index
    %c0_3 = arith.constant 0 : index
    %c0_4 = arith.constant 0 : index
    %3 = vector.load %arg2[%c0_2, %c0_3, %c0_4] : memref<1x8x32xf32, #tpu.memory_space<vmem>>, vector<1x8x32xf32>
    %4 = vector.shape_cast %3 : vector<1x8x32xf32> to vector<8x32xf32>
    %5 = arith.truncf %4 : vector<8x32xf32> to vector<8x32xbf16>
    %c0_5 = arith.constant 0 : index
    %c0_6 = arith.constant 0 : index
    %6 = vector.load %arg3[%c0_5, %c0_6] : memref<32x32xbf16, #tpu.memory_space<vmem>>, vector<32x32xbf16>
    %cst = arith.constant dense<0.000000e+00> : vector<8x32xf32>
    %7 = tpu.matmul %2, %6, %cst {dimension_numbers = #tpu.dot_dimension_numbers<[1], [0], [0], [1], [0, 0, 1, 1], [], []>} : vector<8x32xbf16>, vector<32x32xbf16>, vector<8x32xf32> -> vector<8x32xf32>
    %c0_7 = arith.constant 0 : index
    %c0_8 = arith.constant 0 : index
    %8 = vector.load %arg4[%c0_7, %c0_8] : memref<32x32xbf16, #tpu.memory_space<vmem>>, vector<32x32xbf16>
    %cst_9 = arith.constant dense<0.000000e+00> : vector<8x32xf32>
    %9 = tpu.matmul %5, %8, %cst_9 {dimension_numbers = #tpu.dot_dimension_numbers<[1], [0], [0], [1], [0, 0, 1, 1], [], []>} : vector<8x32xbf16>, vector<32x32xbf16>, vector<8x32xf32> -> vector<8x32xf32>
    %c0_10 = arith.constant 0 : index
    %c0_11 = arith.constant 0 : index
    %10 = vector.load %arg5[%c0_10, %c0_11] : memref<32x32xbf16, #tpu.memory_space<vmem>>, vector<32x32xbf16>
    %cst_12 = arith.constant dense<0.000000e+00> : vector<8x32xf32>
    %11 = tpu.matmul %5, %10, %cst_12 {dimension_numbers = #tpu.dot_dimension_numbers<[1], [0], [0], [1], [0, 0, 1, 1], [], []>} : vector<8x32xbf16>, vector<32x32xbf16>, vector<8x32xf32> -> vector<8x32xf32>
    %12 = vector.shape_cast %7 : vector<8x32xf32> to vector<1x8x32xf32>
    %13 = arith.truncf %12 : vector<1x8x32xf32> to vector<1x8x32xbf16>
    %14 = vector.shape_cast %9 : vector<8x32xf32> to vector<1x8x32xf32>
    %15 = arith.truncf %14 : vector<1x8x32xf32> to vector<1x8x32xbf16>
    %16 = vector.shape_cast %11 : vector<8x32xf32> to vector<1x8x32xf32>
    %17 = arith.truncf %16 : vector<1x8x32xf32> to vector<1x8x32xbf16>
    %18 = vector.extract_strided_slice %13 {offsets = [0, 0, 0], sizes = [1, 8, 4], strides = [1, 1, 1]} : vector<1x8x32xbf16> to vector<1x8x4xbf16>
    %19 = vector.extract_strided_slice %15 {offsets = [0, 0, 0], sizes = [1, 8, 4], strides = [1, 1, 1]} : vector<1x8x32xbf16> to vector<1x8x4xbf16>
    %20 = vector.extract_strided_slice %17 {offsets = [0, 0, 0], sizes = [1, 8, 4], strides = [1, 1, 1]} : vector<1x8x32xbf16> to vector<1x8x4xbf16>
    "tpu.trace_start"() <{level = 10 : i32, message = "bld,bsd->bls"}> : () -> ()
    %cst_13 = arith.constant dense<0.000000e+00> : vector<1x8x8xf32>
    %21 = tpu.matmul %18, %19, %cst_13 {dimension_numbers = #tpu.dot_dimension_numbers<[2], [2], [1], [1], [0, 0, 0, 1, 1, 1], [0], [0]>} : vector<1x8x4xbf16>, vector<1x8x4xbf16>, vector<1x8x8xf32> -> vector<1x8x8xf32>
    "tpu.trace_stop"() : () -> ()
    %cst_14 = arith.constant 5.000000e-01 : f32
    %22 = vector.broadcast %cst_14 : f32 to vector<1x8x8xf32>
    %23 = arith.mulf %21, %22 : vector<1x8x8xf32>
    %cst_15 = arith.constant dense<0xFF800000> : vector<1x8xf32>
    %24 = vector.multi_reduction <maximumf>, %23, %cst_15 [2] : vector<1x8x8xf32> to vector<1x8xf32>
    %25 = vector.shape_cast %24 : vector<1x8xf32> to vector<1x8x1xf32>
    %26 = vector.broadcast %25 : vector<1x8x1xf32> to vector<1x8x8xf32>
    %27 = arith.subf %23, %26 : vector<1x8x8xf32>
    %28 = math.exp %27 : vector<1x8x8xf32>
    %cst_16 = arith.constant dense<0.000000e+00> : vector<1x8xf32>
    %29 = vector.multi_reduction <add>, %28, %cst_16 [2] : vector<1x8x8xf32> to vector<1x8xf32>
    %30 = vector.shape_cast %29 : vector<1x8xf32> to vector<1x8x1xf32>
    %31 = tpu.reciprocal %30 {approx = true} : vector<1x8x1xf32> -> vector<1x8x1xf32>
    %32 = vector.broadcast %31 : vector<1x8x1xf32> to vector<1x8x8xf32>
    %33 = arith.mulf %28, %32 : vector<1x8x8xf32>
    %34 = arith.truncf %33 : vector<1x8x8xf32> to vector<1x8x8xbf16>
    "tpu.trace_start"() <{level = 10 : i32, message = "bls,bsd->bld"}> : () -> ()
    %cst_17 = arith.constant dense<0.000000e+00> : vector<1x8x4xf32>
    %35 = tpu.matmul %34, %20, %cst_17 {dimension_numbers = #tpu.dot_dimension_numbers<[2], [1], [1], [2], [0, 0, 0, 1, 1, 2], [0], [0]>} : vector<1x8x8xbf16>, vector<1x8x4xbf16>, vector<1x8x4xf32> -> vector<1x8x4xf32>
    "tpu.trace_stop"() : () -> ()
    %36 = vector.extract_strided_slice %13 {offsets = [0, 0, 4], sizes = [1, 8, 4], strides = [1, 1, 1]} : vector<1x8x32xbf16> to vector<1x8x4xbf16>
    %37 = vector.extract_strided_slice %15 {offsets = [0, 0, 4], sizes = [1, 8, 4], strides = [1, 1, 1]} : vector<1x8x32xbf16> to vector<1x8x4xbf16>
    %38 = vector.extract_strided_slice %17 {offsets = [0, 0, 4], sizes = [1, 8, 4], strides = [1, 1, 1]} : vector<1x8x32xbf16> to vector<1x8x4xbf16>
    "tpu.trace_start"() <{level = 10 : i32, message = "bld,bsd->bls"}> : () -> ()
    %cst_18 = arith.constant dense<0.000000e+00> : vector<1x8x8xf32>
    %39 = tpu.matmul %36, %37, %cst_18 {dimension_numbers = #tpu.dot_dimension_numbers<[2], [2], [1], [1], [0, 0, 0, 1, 1, 1], [0], [0]>} : vector<1x8x4xbf16>, vector<1x8x4xbf16>, vector<1x8x8xf32> -> vector<1x8x8xf32>
    "tpu.trace_stop"() : () -> ()
    %cst_19 = arith.constant 5.000000e-01 : f32
    %40 = vector.broadcast %cst_19 : f32 to vector<1x8x8xf32>
    %41 = arith.mulf %39, %40 : vector<1x8x8xf32>
    %cst_20 = arith.constant dense<0xFF800000> : vector<1x8xf32>
    %42 = vector.multi_reduction <maximumf>, %41, %cst_20 [2] : vector<1x8x8xf32> to vector<1x8xf32>
    %43 = vector.shape_cast %42 : vector<1x8xf32> to vector<1x8x1xf32>
    %44 = vector.broadcast %43 : vector<1x8x1xf32> to vector<1x8x8xf32>
    %45 = arith.subf %41, %44 : vector<1x8x8xf32>
    %46 = math.exp %45 : vector<1x8x8xf32>
    %cst_21 = arith.constant dense<0.000000e+00> : vector<1x8xf32>
    %47 = vector.multi_reduction <add>, %46, %cst_21 [2] : vector<1x8x8xf32> to vector<1x8xf32>
    %48 = vector.shape_cast %47 : vector<1x8xf32> to vector<1x8x1xf32>
    %49 = tpu.reciprocal %48 {approx = true} : vector<1x8x1xf32> -> vector<1x8x1xf32>
    %50 = vector.broadcast %49 : vector<1x8x1xf32> to vector<1x8x8xf32>
    %51 = arith.mulf %46, %50 : vector<1x8x8xf32>
    %52 = arith.truncf %51 : vector<1x8x8xf32> to vector<1x8x8xbf16>
    "tpu.trace_start"() <{level = 10 : i32, message = "bls,bsd->bld"}> : () -> ()
    %cst_22 = arith.constant dense<0.000000e+00> : vector<1x8x4xf32>
    %53 = tpu.matmul %52, %38, %cst_22 {dimension_numbers = #tpu.dot_dimension_numbers<[2], [1], [1], [2], [0, 0, 0, 1, 1, 2], [0], [0]>} : vector<1x8x8xbf16>, vector<1x8x4xbf16>, vector<1x8x4xf32> -> vector<1x8x4xf32>
    "tpu.trace_stop"() : () -> ()
    %54 = vector.extract_strided_slice %13 {offsets = [0, 0, 8], sizes = [1, 8, 4], strides = [1, 1, 1]} : vector<1x8x32xbf16> to vector<1x8x4xbf16>
    %55 = vector.extract_strided_slice %15 {offsets = [0, 0, 8], sizes = [1, 8, 4], strides = [1, 1, 1]} : vector<1x8x32xbf16> to vector<1x8x4xbf16>
    %56 = vector.extract_strided_slice %17 {offsets = [0, 0, 8], sizes = [1, 8, 4], strides = [1, 1, 1]} : vector<1x8x32xbf16> to vector<1x8x4xbf16>
    "tpu.trace_start"() <{level = 10 : i32, message = "bld,bsd->bls"}> : () -> ()
    %cst_23 = arith.constant dense<0.000000e+00> : vector<1x8x8xf32>
    %57 = tpu.matmul %54, %55, %cst_23 {dimension_numbers = #tpu.dot_dimension_numbers<[2], [2], [1], [1], [0, 0, 0, 1, 1, 1], [0], [0]>} : vector<1x8x4xbf16>, vector<1x8x4xbf16>, vector<1x8x8xf32> -> vector<1x8x8xf32>
    "tpu.trace_stop"() : () -> ()
    %cst_24 = arith.constant 5.000000e-01 : f32
    %58 = vector.broadcast %cst_24 : f32 to vector<1x8x8xf32>
    %59 = arith.mulf %57, %58 : vector<1x8x8xf32>
    %cst_25 = arith.constant dense<0xFF800000> : vector<1x8xf32>
    %60 = vector.multi_reduction <maximumf>, %59, %cst_25 [2] : vector<1x8x8xf32> to vector<1x8xf32>
    %61 = vector.shape_cast %60 : vector<1x8xf32> to vector<1x8x1xf32>
    %62 = vector.broadcast %61 : vector<1x8x1xf32> to vector<1x8x8xf32>
    %63 = arith.subf %59, %62 : vector<1x8x8xf32>
    %64 = math.exp %63 : vector<1x8x8xf32>
    %cst_26 = arith.constant dense<0.000000e+00> : vector<1x8xf32>
    %65 = vector.multi_reduction <add>, %64, %cst_26 [2] : vector<1x8x8xf32> to vector<1x8xf32>
    %66 = vector.shape_cast %65 : vector<1x8xf32> to vector<1x8x1xf32>
    %67 = tpu.reciprocal %66 {approx = true} : vector<1x8x1xf32> -> vector<1x8x1xf32>
    %68 = vector.broadcast %67 : vector<1x8x1xf32> to vector<1x8x8xf32>
    %69 = arith.mulf %64, %68 : vector<1x8x8xf32>
    %70 = arith.truncf %69 : vector<1x8x8xf32> to vector<1x8x8xbf16>
    "tpu.trace_start"() <{level = 10 : i32, message = "bls,bsd->bld"}> : () -> ()
    %cst_27 = arith.constant dense<0.000000e+00> : vector<1x8x4xf32>
    %71 = tpu.matmul %70, %56, %cst_27 {dimension_numbers = #tpu.dot_dimension_numbers<[2], [1], [1], [2], [0, 0, 0, 1, 1, 2], [0], [0]>} : vector<1x8x8xbf16>, vector<1x8x4xbf16>, vector<1x8x4xf32> -> vector<1x8x4xf32>
    "tpu.trace_stop"() : () -> ()
    %72 = vector.extract_strided_slice %13 {offsets = [0, 0, 12], sizes = [1, 8, 4], strides = [1, 1, 1]} : vector<1x8x32xbf16> to vector<1x8x4xbf16>
    %73 = vector.extract_strided_slice %15 {offsets = [0, 0, 12], sizes = [1, 8, 4], strides = [1, 1, 1]} : vector<1x8x32xbf16> to vector<1x8x4xbf16>
    %74 = vector.extract_strided_slice %17 {offsets = [0, 0, 12], sizes = [1, 8, 4], strides = [1, 1, 1]} : vector<1x8x32xbf16> to vector<1x8x4xbf16>
    "tpu.trace_start"() <{level = 10 : i32, message = "bld,bsd->bls"}> : () -> ()
    %cst_28 = arith.constant dense<0.000000e+00> : vector<1x8x8xf32>
    %75 = tpu.matmul %72, %73, %cst_28 {dimension_numbers = #tpu.dot_dimension_numbers<[2], [2], [1], [1], [0, 0, 0, 1, 1, 1], [0], [0]>} : vector<1x8x4xbf16>, vector<1x8x4xbf16>, vector<1x8x8xf32> -> vector<1x8x8xf32>
    "tpu.trace_stop"() : () -> ()
    %cst_29 = arith.constant 5.000000e-01 : f32
    %76 = vector.broadcast %cst_29 : f32 to vector<1x8x8xf32>
    %77 = arith.mulf %75, %76 : vector<1x8x8xf32>
    %cst_30 = arith.constant dense<0xFF800000> : vector<1x8xf32>
    %78 = vector.multi_reduction <maximumf>, %77, %cst_30 [2] : vector<1x8x8xf32> to vector<1x8xf32>
    %79 = vector.shape_cast %78 : vector<1x8xf32> to vector<1x8x1xf32>
    %80 = vector.broadcast %79 : vector<1x8x1xf32> to vector<1x8x8xf32>
    %81 = arith.subf %77, %80 : vector<1x8x8xf32>
    %82 = math.exp %81 : vector<1x8x8xf32>
    %cst_31 = arith.constant dense<0.000000e+00> : vector<1x8xf32>
    %83 = vector.multi_reduction <add>, %82, %cst_31 [2] : vector<1x8x8xf32> to vector<1x8xf32>
    %84 = vector.shape_cast %83 : vector<1x8xf32> to vector<1x8x1xf32>
    %85 = tpu.reciprocal %84 {approx = true} : vector<1x8x1xf32> -> vector<1x8x1xf32>
    %86 = vector.broadcast %85 : vector<1x8x1xf32> to vector<1x8x8xf32>
    %87 = arith.mulf %82, %86 : vector<1x8x8xf32>
    %88 = arith.truncf %87 : vector<1x8x8xf32> to vector<1x8x8xbf16>
    "tpu.trace_start"() <{level = 10 : i32, message = "bls,bsd->bld"}> : () -> ()
    %cst_32 = arith.constant dense<0.000000e+00> : vector<1x8x4xf32>
    %89 = tpu.matmul %88, %74, %cst_32 {dimension_numbers = #tpu.dot_dimension_numbers<[2], [1], [1], [2], [0, 0, 0, 1, 1, 2], [0], [0]>} : vector<1x8x8xbf16>, vector<1x8x4xbf16>, vector<1x8x4xf32> -> vector<1x8x4xf32>
    "tpu.trace_stop"() : () -> ()
    %90 = vector.extract_strided_slice %13 {offsets = [0, 0, 16], sizes = [1, 8, 4], strides = [1, 1, 1]} : vector<1x8x32xbf16> to vector<1x8x4xbf16>
    %91 = vector.extract_strided_slice %15 {offsets = [0, 0, 16], sizes = [1, 8, 4], strides = [1, 1, 1]} : vector<1x8x32xbf16> to vector<1x8x4xbf16>
    %92 = vector.extract_strided_slice %17 {offsets = [0, 0, 16], sizes = [1, 8, 4], strides = [1, 1, 1]} : vector<1x8x32xbf16> to vector<1x8x4xbf16>
    "tpu.trace_start"() <{level = 10 : i32, message = "bld,bsd->bls"}> : () -> ()
    %cst_33 = arith.constant dense<0.000000e+00> : vector<1x8x8xf32>
    %93 = tpu.matmul %90, %91, %cst_33 {dimension_numbers = #tpu.dot_dimension_numbers<[2], [2], [1], [1], [0, 0, 0, 1, 1, 1], [0], [0]>} : vector<1x8x4xbf16>, vector<1x8x4xbf16>, vector<1x8x8xf32> -> vector<1x8x8xf32>
    "tpu.trace_stop"() : () -> ()
    %cst_34 = arith.constant 5.000000e-01 : f32
    %94 = vector.broadcast %cst_34 : f32 to vector<1x8x8xf32>
    %95 = arith.mulf %93, %94 : vector<1x8x8xf32>
    %cst_35 = arith.constant dense<0xFF800000> : vector<1x8xf32>
    %96 = vector.multi_reduction <maximumf>, %95, %cst_35 [2] : vector<1x8x8xf32> to vector<1x8xf32>
    %97 = vector.shape_cast %96 : vector<1x8xf32> to vector<1x8x1xf32>
    %98 = vector.broadcast %97 : vector<1x8x1xf32> to vector<1x8x8xf32>
    %99 = arith.subf %95, %98 : vector<1x8x8xf32>
    %100 = math.exp %99 : vector<1x8x8xf32>
    %cst_36 = arith.constant dense<0.000000e+00> : vector<1x8xf32>
    %101 = vector.multi_reduction <add>, %100, %cst_36 [2] : vector<1x8x8xf32> to vector<1x8xf32>
    %102 = vector.shape_cast %101 : vector<1x8xf32> to vector<1x8x1xf32>
    %103 = tpu.reciprocal %102 {approx = true} : vector<1x8x1xf32> -> vector<1x8x1xf32>
    %104 = vector.broadcast %103 : vector<1x8x1xf32> to vector<1x8x8xf32>
    %105 = arith.mulf %100, %104 : vector<1x8x8xf32>
    %106 = arith.truncf %105 : vector<1x8x8xf32> to vector<1x8x8xbf16>
    "tpu.trace_start"() <{level = 10 : i32, message = "bls,bsd->bld"}> : () -> ()
    %cst_37 = arith.constant dense<0.000000e+00> : vector<1x8x4xf32>
    %107 = tpu.matmul %106, %92, %cst_37 {dimension_numbers = #tpu.dot_dimension_numbers<[2], [1], [1], [2], [0, 0, 0, 1, 1, 2], [0], [0]>} : vector<1x8x8xbf16>, vector<1x8x4xbf16>, vector<1x8x4xf32> -> vector<1x8x4xf32>
    "tpu.trace_stop"() : () -> ()
    %108 = vector.extract_strided_slice %13 {offsets = [0, 0, 20], sizes = [1, 8, 4], strides = [1, 1, 1]} : vector<1x8x32xbf16> to vector<1x8x4xbf16>
    %109 = vector.extract_strided_slice %15 {offsets = [0, 0, 20], sizes = [1, 8, 4], strides = [1, 1, 1]} : vector<1x8x32xbf16> to vector<1x8x4xbf16>
    %110 = vector.extract_strided_slice %17 {offsets = [0, 0, 20], sizes = [1, 8, 4], strides = [1, 1, 1]} : vector<1x8x32xbf16> to vector<1x8x4xbf16>
    "tpu.trace_start"() <{level = 10 : i32, message = "bld,bsd->bls"}> : () -> ()
    %cst_38 = arith.constant dense<0.000000e+00> : vector<1x8x8xf32>
    %111 = tpu.matmul %108, %109, %cst_38 {dimension_numbers = #tpu.dot_dimension_numbers<[2], [2], [1], [1], [0, 0, 0, 1, 1, 1], [0], [0]>} : vector<1x8x4xbf16>, vector<1x8x4xbf16>, vector<1x8x8xf32> -> vector<1x8x8xf32>
    "tpu.trace_stop"() : () -> ()
    %cst_39 = arith.constant 5.000000e-01 : f32
    %112 = vector.broadcast %cst_39 : f32 to vector<1x8x8xf32>
    %113 = arith.mulf %111, %112 : vector<1x8x8xf32>
    %cst_40 = arith.constant dense<0xFF800000> : vector<1x8xf32>
    %114 = vector.multi_reduction <maximumf>, %113, %cst_40 [2] : vector<1x8x8xf32> to vector<1x8xf32>
    %115 = vector.shape_cast %114 : vector<1x8xf32> to vector<1x8x1xf32>
    %116 = vector.broadcast %115 : vector<1x8x1xf32> to vector<1x8x8xf32>
    %117 = arith.subf %113, %116 : vector<1x8x8xf32>
    %118 = math.exp %117 : vector<1x8x8xf32>
    %cst_41 = arith.constant dense<0.000000e+00> : vector<1x8xf32>
    %119 = vector.multi_reduction <add>, %118, %cst_41 [2] : vector<1x8x8xf32> to vector<1x8xf32>
    %120 = vector.shape_cast %119 : vector<1x8xf32> to vector<1x8x1xf32>
    %121 = tpu.reciprocal %120 {approx = true} : vector<1x8x1xf32> -> vector<1x8x1xf32>
    %122 = vector.broadcast %121 : vector<1x8x1xf32> to vector<1x8x8xf32>
    %123 = arith.mulf %118, %122 : vector<1x8x8xf32>
    %124 = arith.truncf %123 : vector<1x8x8xf32> to vector<1x8x8xbf16>
    "tpu.trace_start"() <{level = 10 : i32, message = "bls,bsd->bld"}> : () -> ()
    %cst_42 = arith.constant dense<0.000000e+00> : vector<1x8x4xf32>
    %125 = tpu.matmul %124, %110, %cst_42 {dimension_numbers = #tpu.dot_dimension_numbers<[2], [1], [1], [2], [0, 0, 0, 1, 1, 2], [0], [0]>} : vector<1x8x8xbf16>, vector<1x8x4xbf16>, vector<1x8x4xf32> -> vector<1x8x4xf32>
    "tpu.trace_stop"() : () -> ()
    %126 = vector.extract_strided_slice %13 {offsets = [0, 0, 24], sizes = [1, 8, 4], strides = [1, 1, 1]} : vector<1x8x32xbf16> to vector<1x8x4xbf16>
    %127 = vector.extract_strided_slice %15 {offsets = [0, 0, 24], sizes = [1, 8, 4], strides = [1, 1, 1]} : vector<1x8x32xbf16> to vector<1x8x4xbf16>
    %128 = vector.extract_strided_slice %17 {offsets = [0, 0, 24], sizes = [1, 8, 4], strides = [1, 1, 1]} : vector<1x8x32xbf16> to vector<1x8x4xbf16>
    "tpu.trace_start"() <{level = 10 : i32, message = "bld,bsd->bls"}> : () -> ()
    %cst_43 = arith.constant dense<0.000000e+00> : vector<1x8x8xf32>
    %129 = tpu.matmul %126, %127, %cst_43 {dimension_numbers = #tpu.dot_dimension_numbers<[2], [2], [1], [1], [0, 0, 0, 1, 1, 1], [0], [0]>} : vector<1x8x4xbf16>, vector<1x8x4xbf16>, vector<1x8x8xf32> -> vector<1x8x8xf32>
    "tpu.trace_stop"() : () -> ()
    %cst_44 = arith.constant 5.000000e-01 : f32
    %130 = vector.broadcast %cst_44 : f32 to vector<1x8x8xf32>
    %131 = arith.mulf %129, %130 : vector<1x8x8xf32>
    %cst_45 = arith.constant dense<0xFF800000> : vector<1x8xf32>
    %132 = vector.multi_reduction <maximumf>, %131, %cst_45 [2] : vector<1x8x8xf32> to vector<1x8xf32>
    %133 = vector.shape_cast %132 : vector<1x8xf32> to vector<1x8x1xf32>
    %134 = vector.broadcast %133 : vector<1x8x1xf32> to vector<1x8x8xf32>
    %135 = arith.subf %131, %134 : vector<1x8x8xf32>
    %136 = math.exp %135 : vector<1x8x8xf32>
    %cst_46 = arith.constant dense<0.000000e+00> : vector<1x8xf32>
    %137 = vector.multi_reduction <add>, %136, %cst_46 [2] : vector<1x8x8xf32> to vector<1x8xf32>
    %138 = vector.shape_cast %137 : vector<1x8xf32> to vector<1x8x1xf32>
    %139 = tpu.reciprocal %138 {approx = true} : vector<1x8x1xf32> -> vector<1x8x1xf32>
    %140 = vector.broadcast %139 : vector<1x8x1xf32> to vector<1x8x8xf32>
    %141 = arith.mulf %136, %140 : vector<1x8x8xf32>
    %142 = arith.truncf %141 : vector<1x8x8xf32> to vector<1x8x8xbf16>
    "tpu.trace_start"() <{level = 10 : i32, message = "bls,bsd->bld"}> : () -> ()
    %cst_47 = arith.constant dense<0.000000e+00> : vector<1x8x4xf32>
    %143 = tpu.matmul %142, %128, %cst_47 {dimension_numbers = #tpu.dot_dimension_numbers<[2], [1], [1], [2], [0, 0, 0, 1, 1, 2], [0], [0]>} : vector<1x8x8xbf16>, vector<1x8x4xbf16>, vector<1x8x4xf32> -> vector<1x8x4xf32>
    "tpu.trace_stop"() : () -> ()
    %144 = vector.extract_strided_slice %13 {offsets = [0, 0, 28], sizes = [1, 8, 4], strides = [1, 1, 1]} : vector<1x8x32xbf16> to vector<1x8x4xbf16>
    %145 = vector.extract_strided_slice %15 {offsets = [0, 0, 28], sizes = [1, 8, 4], strides = [1, 1, 1]} : vector<1x8x32xbf16> to vector<1x8x4xbf16>
    %146 = vector.extract_strided_slice %17 {offsets = [0, 0, 28], sizes = [1, 8, 4], strides = [1, 1, 1]} : vector<1x8x32xbf16> to vector<1x8x4xbf16>
    "tpu.trace_start"() <{level = 10 : i32, message = "bld,bsd->bls"}> : () -> ()
    %cst_48 = arith.constant dense<0.000000e+00> : vector<1x8x8xf32>
    %147 = tpu.matmul %144, %145, %cst_48 {dimension_numbers = #tpu.dot_dimension_numbers<[2], [2], [1], [1], [0, 0, 0, 1, 1, 1], [0], [0]>} : vector<1x8x4xbf16>, vector<1x8x4xbf16>, vector<1x8x8xf32> -> vector<1x8x8xf32>
    "tpu.trace_stop"() : () -> ()
    %cst_49 = arith.constant 5.000000e-01 : f32
    %148 = vector.broadcast %cst_49 : f32 to vector<1x8x8xf32>
    %149 = arith.mulf %147, %148 : vector<1x8x8xf32>
    %cst_50 = arith.constant dense<0xFF800000> : vector<1x8xf32>
    %150 = vector.multi_reduction <maximumf>, %149, %cst_50 [2] : vector<1x8x8xf32> to vector<1x8xf32>
    %151 = vector.shape_cast %150 : vector<1x8xf32> to vector<1x8x1xf32>
    %152 = vector.broadcast %151 : vector<1x8x1xf32> to vector<1x8x8xf32>
    %153 = arith.subf %149, %152 : vector<1x8x8xf32>
    %154 = math.exp %153 : vector<1x8x8xf32>
    %cst_51 = arith.constant dense<0.000000e+00> : vector<1x8xf32>
    %155 = vector.multi_reduction <add>, %154, %cst_51 [2] : vector<1x8x8xf32> to vector<1x8xf32>
    %156 = vector.shape_cast %155 : vector<1x8xf32> to vector<1x8x1xf32>
    %157 = tpu.reciprocal %156 {approx = true} : vector<1x8x1xf32> -> vector<1x8x1xf32>
    %158 = vector.broadcast %157 : vector<1x8x1xf32> to vector<1x8x8xf32>
    %159 = arith.mulf %154, %158 : vector<1x8x8xf32>
    %160 = arith.truncf %159 : vector<1x8x8xf32> to vector<1x8x8xbf16>
    "tpu.trace_start"() <{level = 10 : i32, message = "bls,bsd->bld"}> : () -> ()
    %cst_52 = arith.constant dense<0.000000e+00> : vector<1x8x4xf32>
    %161 = tpu.matmul %160, %146, %cst_52 {dimension_numbers = #tpu.dot_dimension_numbers<[2], [1], [1], [2], [0, 0, 0, 1, 1, 2], [0], [0]>} : vector<1x8x8xbf16>, vector<1x8x4xbf16>, vector<1x8x4xf32> -> vector<1x8x4xf32>
    "tpu.trace_stop"() : () -> ()
    %162 = tpu.concatenate %35, %53, %71, %89, %107, %125, %143, %161 in 2 : vector<1x8x4xf32>, vector<1x8x4xf32>, vector<1x8x4xf32>, vector<1x8x4xf32>, vector<1x8x4xf32>, vector<1x8x4xf32>, vector<1x8x4xf32>, vector<1x8x4xf32> -> vector<1x8x32xf32>
    %163 = vector.shape_cast %162 : vector<1x8x32xf32> to vector<8x32xf32>
    %164 = arith.truncf %163 : vector<8x32xf32> to vector<8x32xbf16>
    %c0_53 = arith.constant 0 : index
    %c0_54 = arith.constant 0 : index
    %165 = vector.load %arg6[%c0_53, %c0_54] : memref<32x32xbf16, #tpu.memory_space<vmem>>, vector<32x32xbf16>
    %cst_55 = arith.constant dense<0.000000e+00> : vector<8x32xf32>
    %166 = tpu.matmul %164, %165, %cst_55 {dimension_numbers = #tpu.dot_dimension_numbers<[1], [0], [0], [1], [0, 0, 1, 1], [], []>} : vector<8x32xbf16>, vector<32x32xbf16>, vector<8x32xf32> -> vector<8x32xf32>
    %c0_56 = arith.constant 0 : index
    %c0_57 = arith.constant 0 : index
    %167 = vector.load %arg7[%c0_56, %c0_57] : memref<1x32xf32, #tpu.memory_space<vmem>>, vector<1x32xf32>
    %168 = vector.broadcast %167 : vector<1x32xf32> to vector<8x32xf32>
    %169 = arith.addf %166, %168 : vector<8x32xf32>
    %170 = vector.shape_cast %169 : vector<8x32xf32> to vector<1x8x32xf32>
    %c0_58 = arith.constant 0 : index
    %c0_59 = arith.constant 0 : index
    %c0_60 = arith.constant 0 : index
    %171 = vector.load %arg8[%c0_58, %c0_59, %c0_60] : memref<1x8x32xf32, #tpu.memory_space<vmem>>, vector<1x8x32xf32>
    tpu.vector_store %arg8[%c0_58, %c0_59, %c0_60], %170 {strides = array<i32>} : memref<1x8x32xf32, #tpu.memory_space<vmem>>, vector<1x8x32xf32>,
    return
  }
  func.func @transform_0(%arg0: i32) -> (i32, i32, i32) {
    %c0_i32 = arith.constant 0 : i32
    %c0_i32_0 = arith.constant 0 : i32
    %c0_i32_1 = arith.constant 0 : i32
    return %arg0, %c0_i32, %c0_i32_0 : i32, i32, i32
  }
  func.func @transform_1(%arg0: i32) -> (i32, i32, i32) {
    %c0_i32 = arith.constant 0 : i32
    %c0_i32_0 = arith.constant 0 : i32
    %c0_i32_1 = arith.constant 0 : i32
    return %arg0, %c0_i32, %c0_i32_0 : i32, i32, i32
  }
  func.func @transform_2(%arg0: i32) -> (i32, i32) {
    %c0_i32 = arith.constant 0 : i32
    %c0_i32_0 = arith.constant 0 : i32
    %c0_i32_1 = arith.constant 0 : i32
    return %c0_i32, %c0_i32_0 : i32, i32
  }
  func.func @transform_3(%arg0: i32) -> (i32, i32) {
    %c0_i32 = arith.constant 0 : i32
    %c0_i32_0 = arith.constant 0 : i32
    %c0_i32_1 = arith.constant 0 : i32
    return %c0_i32, %c0_i32_0 : i32, i32
  }
  func.func @transform_4(%arg0: i32) -> (i32, i32) {
    %c0_i32 = arith.constant 0 : i32
    %c0_i32_0 = arith.constant 0 : i32
    %c0_i32_1 = arith.constant 0 : i32
    return %c0_i32, %c0_i32_0 : i32, i32
  }
  func.func @transform_5(%arg0: i32) -> (i32, i32) {
    %c0_i32 = arith.constant 0 : i32
    %c0_i32_0 = arith.constant 0 : i32
    %c0_i32_1 = arith.constant 0 : i32
    return %c0_i32, %c0_i32_0 : i32, i32
  }
  func.func @transform_6(%arg0: i32) -> (i32, i32) {
    %c0_i32 = arith.constant 0 : i32
    %c0_i32_0 = arith.constant 0 : i32
    %c0_i32_1 = arith.constant 0 : i32
    return %c0_i32, %c0_i32_0 : i32, i32
  }
  func.func @transform_7(%arg0: i32) -> (i32, i32, i32) {
    %c0_i32 = arith.constant 0 : i32
    %c0_i32_0 = arith.constant 0 : i32
    %c0_i32_1 = arith.constant 0 : i32
    return %arg0, %c0_i32, %c0_i32_0 : i32, i32, i32
  }
}

</mosaic_0001>

<llo_original>
// kernel: tpu_custom_call.1
$region0: #{tpu_custom_call.1}
  #allocation0 [shape = 'u32[]', space=smem, size = 0x4, offset = 0x4, fixed_abs, tag = 'smem constant byte address 0x4 - core index']
  #allocation1 [shape = 'u32[144,128]{1,0:T(1,128)}', space=vmem, size = 0x12000, scoped, tag = 'internal scratch']
  %s0 = inlined_call_operand.hbm [shape: f32[2,8,32], index: 0, kind: input, shape index: {}]
  %s1 = inlined_call_operand.hbm [shape: f32[2,8,32], index: 1, kind: input, shape index: {}]
  %s2 = inlined_call_operand.hbm [shape: bf16[32,32], index: 2, kind: input, shape index: {}]
  %s3 = inlined_call_operand.hbm [shape: bf16[32,32], index: 3, kind: input, shape index: {}]
  %s4 = inlined_call_operand.hbm [shape: bf16[32,32], index: 4, kind: input, shape index: {}]
  %s5 = inlined_call_operand.vmem [shape: bf16[32,32], index: 5, kind: input, shape index: {}]
  %s6 = inlined_call_operand.vmem [shape: f32[1,32], index: 6, kind: input, shape index: {}]
  %s7 = inlined_call_operand.hbm [shape: f32[2,8,32], index: 7, kind: output, shape index: {}]
  %s8 = sld [smem:[#allocation0]]
  $region81: #{tpu_custom_call.1} parent=0
    _
  %s10 = ssub.s32 1, %s8
  %s11 = scalar_select 0, %s10, %s8
  $region1: #{tpu_custom_call.1} parent=0
    #allocation2 [shape = 'u8[8192]{0}', space=vmem, size = 0x2000, scoped, tag = 'input window, operand 0']
    #allocation3 [shape = 's32[2]{0}', space=sflag, size = 0x8, scoped, tag = 'scoped memory for tpu_custom_call.1']
    #allocation4 [shape = 's32[2]{0}', space=sflag, size = 0x8, scoped, tag = 'scoped memory for tpu_custom_call.1']
    #allocation5 [shape = 'u8[8192]{0}', space=vmem, size = 0x2000, scoped, tag = 'input window, operand 1']
    #allocation6 [shape = 's32[2]{0}', space=sflag, size = 0x8, scoped, tag = 'scoped memory for tpu_custom_call.1']
    #allocation7 [shape = 'u8[8192]{0}', space=vmem, size = 0x2000, scoped, tag = 'input window, operand 2, single buffered']
    #allocation8 [shape = 'u8[8192]{0}', space=vmem, size = 0x2000, scoped, tag = 'input window, operand 3, single buffered']
    #allocation9 [shape = 's32[1]{0}', space=sflag, size = 0x4, scoped, tag = 'scoped memory for tpu_custom_call.1']
    #allocation10 [shape = 'u8[8192]{0}', space=vmem, size = 0x2000, scoped, tag = 'input window, operand 4, single buffered']
    #allocation11 [shape = 'u8[8192]{0}', space=vmem, size = 0x2000, scoped, tag = 'output window, operand 0']
    %12 = vsyncpa [#allocation3], 0
    %s13 = scalar_lea.sflag [#allocation3], 1
    %14 = vsyncpa %s13, 0
    %15 = vsyncpa [#allocation6], 0
    %s16 = scalar_lea.sflag [#allocation6], 1
    %17 = vsyncpa %s16, 0
    %18 = vsyncpa [#allocation9], 0
    %19 = vsyncpa [#allocation4], 0
    %s20 = scalar_lea.sflag [#allocation4], 1
    %21 = vsyncpa %s20, 0
    loop: start=0, step=1, limit=4
    $region2: #{tpu_custom_call.1} parent=1 // loop_pre_header
      _
    $region3: #{tpu_custom_call.1} parent=1 // loop_header
      %s23 = sphi 0, %s27
      %p24 = scmp.ge.s32.totalorder %s23, 4
      %s33 = sphi 0, %s35
      %s36 = sphi 0, %s33
      %s37 = sphi 0, %s36
      %s53 = sphi 0, %s37
      %s59 = sphi 0, %s61
      %s62 = sphi 0, %s59
      %s63 = sphi 0, %s62
      %s79 = sphi 0, %s63
      %s83 = sphi 0, %s83
      %s85 = sphi 0, %s83
      %s86 = sphi 0, %s85
      %s100 = sphi 0, %s86
      %s104 = sphi 0, %s104
      %s106 = sphi 0, %s104
      %s107 = sphi 0, %s106
      %s121 = sphi 0, %s107
      %s125 = sphi 0, %s125
      %s127 = sphi 0, %s125
      %s128 = sphi 0, %s127
      %s142 = sphi 0, %s128
      %s146 = sphi 0, %s146
      %s148 = sphi 0, %s146
      %s149 = sphi 0, %s148
      %s163 = sphi 0, %s149
      %s167 = sphi 0, %s167
      %s169 = sphi 0, %s167
      %s170 = sphi 0, %s169
      %s184 = sphi 0, %s170
      %s190 = sphi 0, %s192
      %s193 = sphi 0, %s190
      %s194 = sphi 0, %s193
      %s210 = sphi 0, %s194
    $region4: #{tpu_custom_call.1} parent=1 // loop_header_branch
      %26 = sbr.rel (%p24) target = $region8
    $region5: #{tpu_custom_call.1} parent=1 // loop_body
      %s28 = ssub.s32 %s23, 1
      %s29 = ssub.s32 %s23, 2
      %s30 = sadd.s32 %s23, 1
      %s31 = ssub.s32 %s23, %s30
      %p32 = scmp.eq.s32.totalorder %s31, 0
      %s34 = sadd.s32 %s33, 1
      %s35 = scalar_select %p32, %s33, %s34
      %p38 = pneg %p32
      %p39 = scmp.eq.s32.totalorder %s23, 1
      %p40 = por %p38, %p39
      %p41 = scmp.ne.s32.totalorder %s33, %s36
      %p42 = scmp.eq.s32.totalorder %s23, 0
      %p43 = por %p41, %p42
      %p44 = scmp.ne.s32.totalorder %s33, %s36
      %p45 = scmp.eq.s32.totalorder %s28, 1
      %p46 = por %p44, %p45
      %p47 = scmp.ne.s32.totalorder %s36, %s37
      %p48 = scmp.eq.s32.totalorder %s28, 0
      %p49 = por %p47, %p48
      %p50 = scmp.ne.s32.totalorder %s36, %s37
      %p51 = scmp.eq.s32.totalorder %s29, 1
      %p52 = por %p50, %p51
      %p54 = scmp.ne.s32.totalorder %s37, %s53
      %p55 = scmp.eq.s32.totalorder %s29, 0
      %p56 = por %p54, %p55
      %s57 = ssub.s32 %s23, %s30
      %p58 = scmp.eq.s32.totalorder %s57, 0
      %s60 = sadd.s32 %s59, 1
      %s61 = scalar_select %p58, %s59, %s60
      %p64 = pneg %p58
      %p65 = scmp.eq.s32.totalorder %s23, 1
      %p66 = por %p64, %p65
      %p67 = scmp.ne.s32.totalorder %s59, %s62
      %p68 = scmp.eq.s32.totalorder %s23, 0
      %p69 = por %p67, %p68
      %p70 = scmp.ne.s32.totalorder %s59, %s62
      %p71 = scmp.eq.s32.totalorder %s28, 1
      %p72 = por %p70, %p71
      %p73 = scmp.ne.s32.totalorder %s62, %s63
      %p74 = scmp.eq.s32.totalorder %s28, 0
      %p75 = por %p73, %p74
      %p76 = scmp.ne.s32.totalorder %s62, %s63
      %p77 = scmp.eq.s32.totalorder %s29, 1
      %p78 = por %p76, %p77
      %p80 = scmp.ne.s32.totalorder %s63, %s79
      %p81 = scmp.eq.s32.totalorder %s29, 0
      %p82 = por %p80, %p81
      %s84 = sadd.s32 %s83, 1
      %p87 = scmp.eq.s32.totalorder %s23, 1
      %p88 = scmp.ne.s32.totalorder %s83, %s85
      %p89 = scmp.eq.s32.totalorder %s23, 0
      %p90 = por %p88, %p89
      %p91 = scmp.ne.s32.totalorder %s83, %s85
      %p92 = scmp.eq.s32.totalorder %s28, 1
      %p93 = por %p91, %p92
      %p94 = scmp.ne.s32.totalorder %s85, %s86
      %p95 = scmp.eq.s32.totalorder %s28, 0
      %p96 = por %p94, %p95
      %p97 = scmp.ne.s32.totalorder %s85, %s86
      %p98 = scmp.eq.s32.totalorder %s29, 1
      %p99 = por %p97, %p98
      %p101 = scmp.ne.s32.totalorder %s86, %s100
      %p102 = scmp.eq.s32.totalorder %s29, 0
      %p103 = por %p101, %p102
      %s105 = sadd.s32 %s104, 1
      %p108 = scmp.eq.s32.totalorder %s23, 1
      %p109 = scmp.ne.s32.totalorder %s104, %s106
      %p110 = scmp.eq.s32.totalorder %s23, 0
      %p111 = por %p109, %p110
      %p112 = scmp.ne.s32.totalorder %s104, %s106
      %p113 = scmp.eq.s32.totalorder %s28, 1
      %p114 = por %p112, %p113
      %p115 = scmp.ne.s32.totalorder %s106, %s107
      %p116 = scmp.eq.s32.totalorder %s28, 0
      %p117 = por %p115, %p116
      %p118 = scmp.ne.s32.totalorder %s106, %s107
      %p119 = scmp.eq.s32.totalorder %s29, 1
      %p120 = por %p118, %p119
      %p122 = scmp.ne.s32.totalorder %s107, %s121
      %p123 = scmp.eq.s32.totalorder %s29, 0
      %p124 = por %p122, %p123
      %s126 = sadd.s32 %s125, 1
      %p129 = scmp.eq.s32.totalorder %s23, 1
      %p130 = scmp.ne.s32.totalorder %s125, %s127
      %p131 = scmp.eq.s32.totalorder %s23, 0
      %p132 = por %p130, %p131
      %p133 = scmp.ne.s32.totalorder %s125, %s127
      %p134 = scmp.eq.s32.totalorder %s28, 1
      %p135 = por %p133, %p134
      %p136 = scmp.ne.s32.totalorder %s127, %s128
      %p137 = scmp.eq.s32.totalorder %s28, 0
      %p138 = por %p136, %p137
      %p139 = scmp.ne.s32.totalorder %s127, %s128
      %p140 = scmp.eq.s32.totalorder %s29, 1
      %p141 = por %p139, %p140
      %p143 = scmp.ne.s32.totalorder %s128, %s142
      %p144 = scmp.eq.s32.totalorder %s29, 0
      %p145 = por %p143, %p144
      %s147 = sadd.s32 %s146, 1
      %p150 = scmp.eq.s32.totalorder %s23, 1
      %p151 = scmp.ne.s32.totalorder %s146, %s148
      %p152 = scmp.eq.s32.totalorder %s23, 0
      %p153 = por %p151, %p152
      %p154 = scmp.ne.s32.totalorder %s146, %s148
      %p155 = scmp.eq.s32.totalorder %s28, 1
      %p156 = por %p154, %p155
      %p157 = scmp.ne.s32.totalorder %s148, %s149
      %p158 = scmp.eq.s32.totalorder %s28, 0
      %p159 = por %p157, %p158
      %p160 = scmp.ne.s32.totalorder %s148, %s149
      %p161 = scmp.eq.s32.totalorder %s29, 1
      %p162 = por %p160, %p161
      %p164 = scmp.ne.s32.totalorder %s149, %s163
      %p165 = scmp.eq.s32.totalorder %s29, 0
      %p166 = por %p164, %p165
      %s168 = sadd.s32 %s167, 1
      %p171 = scmp.eq.s32.totalorder %s23, 1
      %p172 = scmp.ne.s32.totalorder %s167, %s169
      %p173 = scmp.eq.s32.totalorder %s23, 0
      %p174 = por %p172, %p173
      %p175 = scmp.ne.s32.totalorder %s167, %s169
      %p176 = scmp.eq.s32.totalorder %s28, 1
      %p177 = por %p175, %p176
      %p178 = scmp.ne.s32.totalorder %s169, %s170
      %p179 = scmp.eq.s32.totalorder %s28, 0
      %p180 = por %p178, %p179
      %p181 = scmp.ne.s32.totalorder %s169, %s170
      %p182 = scmp.eq.s32.totalorder %s29, 1
      %p183 = por %p181, %p182
      %p185 = scmp.ne.s32.totalorder %s170, %s184
      %p186 = scmp.eq.s32.totalorder %s29, 0
      %p187 = por %p185, %p186
      %s188 = ssub.s32 %s23, %s30
      %p189 = scmp.eq.s32.totalorder %s188, 0
      %s191 = sadd.s32 %s190, 1
      %s192 = scalar_select %p189, %s190, %s191
      %p195 = pneg %p189
      %p196 = scmp.eq.s32.totalorder %s23, 1
      %p197 = por %p195, %p196
      %p198 = scmp.ne.s32.totalorder %s190, %s193
      %p199 = scmp.eq.s32.totalorder %s23, 0
      %p200 = por %p198, %p199
      %p201 = scmp.ne.s32.totalorder %s190, %s193
      %p202 = scmp.eq.s32.totalorder %s28, 1
      %p203 = por %p201, %p202
      %p204 = scmp.ne.s32.totalorder %s193, %s194
      %p205 = scmp.eq.s32.totalorder %s28, 0
      %p206 = por %p204, %p205
      %p207 = scmp.ne.s32.totalorder %s193, %s194
      %p208 = scmp.eq.s32.totalorder %s29, 1
      %p209 = por %p207, %p208
      %p211 = scmp.ne.s32.totalorder %s194, %s210
      %p212 = scmp.eq.s32.totalorder %s29, 0
      %p213 = por %p211, %p212
      %p214 = scmp.le.s32.totalorder 1, %s23
      %p215 = scmp.lt.s32.totalorder %s23, 3
      %p216 = pnand %p214, %p215
      %p217 = pneg %p216
      // Predicated region
      $region9: #{tpu_custom_call.1} parent=5 // pred_check
        _
      $region10: #{tpu_custom_call.1} parent=5 // pred_check_branch
        %219 = sbr.rel (%p216) target = $region12
      $region11: #{tpu_custom_call.1} parent=5 // pred_region
        %s220 = ssub.s32 %s23, 1
        // Predicated region
        $region13: #{tpu_custom_call.1} parent=11 // pred_check
          %p221 = pneg %p96
        $region14: #{tpu_custom_call.1} parent=11 // pred_check_branch
          %223 = sbr.rel (%p221) target = $region16
        $region15: #{tpu_custom_call.1} parent=11 // pred_region
          %s225 = ssub.s32 256, 256
          %226 = vsyncadd [#allocation6], %s225
          %s227 = sshll.u32 [#allocation7], 4
          %s228 = int_to_ptr.vmem [resolvable:$true] %s227
          %233 = dma.hbm_to_vmem [thread:$0]  %s2, 256, %s228, [#allocation6], 64, 64, 4
        $region16: #{tpu_custom_call.1} parent=11 // pred_fallthru
          _
        // Predicated region
        $region17: #{tpu_custom_call.1} parent=11 // pred_check
          %p234 = pneg %p117
        $region18: #{tpu_custom_call.1} parent=11 // pred_check_branch
          %236 = sbr.rel (%p234) target = $region20
        $region19: #{tpu_custom_call.1} parent=11 // pred_region
          %s238 = ssub.s32 256, 256
          %239 = vsyncadd [#allocation9], %s238
          %s240 = sshll.u32 [#allocation8], 4
          %s241 = int_to_ptr.vmem [resolvable:$true] %s240
          %246 = dma.hbm_to_vmem [thread:$0]  %s3, 256, %s241, [#allocation9], 64, 64, 4
        $region20: #{tpu_custom_call.1} parent=11 // pred_fallthru
          _
        // Predicated region
        $region21: #{tpu_custom_call.1} parent=11 // pred_check
          %p247 = pneg %p138
        $region22: #{tpu_custom_call.1} parent=11 // pred_check_branch
          %249 = sbr.rel (%p247) target = $region24
        $region23: #{tpu_custom_call.1} parent=11 // pred_region
          %s251 = ssub.s32 256, 256
          %252 = vsyncadd [#allocation9], %s251
          %s253 = sshll.u32 [#allocation10], 4
          %s254 = int_to_ptr.vmem [resolvable:$true] %s253
          %259 = dma.hbm_to_vmem [thread:$0]  %s4, 256, %s254, [#allocation9], 64, 64, 4
        $region24: #{tpu_custom_call.1} parent=11 // pred_fallthru
          _
        // Predicated region
        $region25: #{tpu_custom_call.1} parent=11 // pred_check
          %p260 = pneg %p159
        $region26: #{tpu_custom_call.1} parent=11 // pred_check_branch
          %262 = sbr.rel (%p260) target = $region28
        $region27: #{tpu_custom_call.1} parent=11 // pred_region
          _
        $region28: #{tpu_custom_call.1} parent=11 // pred_fallthru
          _
        // Predicated region
        $region29: #{tpu_custom_call.1} parent=11 // pred_check
          %p263 = pneg %p180
        $region30: #{tpu_custom_call.1} parent=11 // pred_check_branch
          %265 = sbr.rel (%p263) target = $region32
        $region31: #{tpu_custom_call.1} parent=11 // pred_region
          _
        $region32: #{tpu_custom_call.1} parent=11 // pred_fallthru
          _
      $region12: #{tpu_custom_call.1} parent=5 // pred_fallthru
        _
      %p266 = scmp.lt.s32.totalorder %s23, 2
      // Predicated region
      $region33: #{tpu_custom_call.1} parent=5 // pred_check
        %p267 = pneg %p266
      $region34: #{tpu_custom_call.1} parent=5 // pred_check_branch
        %269 = sbr.rel (%p267) target = $region36
      $region35: #{tpu_custom_call.1} parent=5 // pred_region
        // Predicated region
        $region37: #{tpu_custom_call.1} parent=35 // pred_check
          %p270 = pneg %p43
        $region38: #{tpu_custom_call.1} parent=35 // pred_check_branch
          %272 = sbr.rel (%p270) target = $region40
        $region39: #{tpu_custom_call.1} parent=35 // pred_region
          %s273 = sand.u32 %s33, 1
          %s274 = scalar_lea.sflag [#allocation3], %s273
          %s275 = sand.u32 %s33, 1
          %s276 = smul.addr %s275, 8
          %s277 = scalar_lea.vmem [#allocation2], %s276
          %s279 = ssub.s32 128, 128
          %280 = vsyncadd %s274, %s279
          %s281 = smul.addr %s23, 128
          %s282 = scalar_lea.hbm %s0, %s281
          %s284 = sshll.u32 %s277, 4
          %s285 = int_to_ptr.vmem [resolvable:$true] %s284
          %287 = dma.hbm_to_vmem [thread:$0]  %s282, 128, %s285, %s274
        $region40: #{tpu_custom_call.1} parent=35 // pred_fallthru
          _
        // Predicated region
        $region41: #{tpu_custom_call.1} parent=35 // pred_check
          %p288 = pneg %p69
        $region42: #{tpu_custom_call.1} parent=35 // pred_check_branch
          %290 = sbr.rel (%p288) target = $region44
        $region43: #{tpu_custom_call.1} parent=35 // pred_region
          %s291 = sand.u32 %s23, 1
          %s292 = scalar_lea.sflag [#allocation6], %s291
          %s293 = sand.u32 %s59, 1
          %s294 = smul.addr %s293, 8
          %s295 = scalar_lea.vmem [#allocation5], %s294
          %s297 = ssub.s32 128, 128
          %298 = vsyncadd %s292, %s297
          %s299 = smul.addr %s23, 128
          %s300 = scalar_lea.hbm %s1, %s299
          %s302 = sshll.u32 %s295, 4
          %s303 = int_to_ptr.vmem [resolvable:$true] %s302
          %305 = dma.hbm_to_vmem [thread:$0]  %s300, 128, %s303, %s292
        $region44: #{tpu_custom_call.1} parent=35 // pred_fallthru
          _
      $region36: #{tpu_custom_call.1} parent=5 // pred_fallthru
        _
      %p306 = scmp.le.s32.totalorder 1, %s23
      %p307 = scmp.lt.s32.totalorder %s23, 3
      %p308 = pnand %p306, %p307
      %p309 = pneg %p308
      // Predicated region
      $region45: #{tpu_custom_call.1} parent=5 // pred_check
        _
      $region46: #{tpu_custom_call.1} parent=5 // pred_check_branch
        %311 = sbr.rel (%p308) target = $region48
      $region47: #{tpu_custom_call.1} parent=5 // pred_region
        %s312 = ssub.s32 %s23, 1
        %s313 = sand.u32 %s36, 1
        %s314 = scalar_lea.sflag [#allocation3], %s313
        %s315 = sand.u32 %s36, 1
        %s316 = smul.addr %s315, 8
        %s317 = scalar_lea.vmem [#allocation2], %s316
        // Predicated region
        $region49: #{tpu_custom_call.1} parent=47 // pred_check
          %p318 = pneg %p49
        $region50: #{tpu_custom_call.1} parent=47 // pred_check_branch
          %320 = sbr.rel (%p318) target = $region52
        $region51: #{tpu_custom_call.1} parent=47 // pred_region
          %321 = dma.done %s314, 128
        $region52: #{tpu_custom_call.1} parent=47 // pred_fallthru
          _
        %s322 = sand.u32 %s28, 1
        %s323 = scalar_lea.sflag [#allocation6], %s322
        %s324 = sand.u32 %s62, 1
        %s325 = smul.addr %s324, 8
        %s326 = scalar_lea.vmem [#allocation5], %s325
        // Predicated region
        $region53: #{tpu_custom_call.1} parent=47 // pred_check
          %p327 = pneg %p75
        $region54: #{tpu_custom_call.1} parent=47 // pred_check_branch
          %329 = sbr.rel (%p327) target = $region56
        $region55: #{tpu_custom_call.1} parent=47 // pred_region
          %330 = dma.done %s323, 128
        $region56: #{tpu_custom_call.1} parent=47 // pred_fallthru
          _
        // Predicated region
        $region57: #{tpu_custom_call.1} parent=47 // pred_check
          %p331 = pneg %p96
        $region58: #{tpu_custom_call.1} parent=47 // pred_check_branch
          %333 = sbr.rel (%p331) target = $region60
        $region59: #{tpu_custom_call.1} parent=47 // pred_region
          %334 = dma.done [#allocation6], 256
        $region60: #{tpu_custom_call.1} parent=47 // pred_fallthru
          _
        // Predicated region
        $region61: #{tpu_custom_call.1} parent=47 // pred_check
          %p335 = pneg %p117
        $region62: #{tpu_custom_call.1} parent=47 // pred_check_branch
          %337 = sbr.rel (%p335) target = $region64
        $region63: #{tpu_custom_call.1} parent=47 // pred_region
          %338 = dma.done [#allocation9], 256
        $region64: #{tpu_custom_call.1} parent=47 // pred_fallthru
          _
        // Predicated region
        $region65: #{tpu_custom_call.1} parent=47 // pred_check
          %p339 = pneg %p138
        $region66: #{tpu_custom_call.1} parent=47 // pred_check_branch
          %341 = sbr.rel (%p339) target = $region68
        $region67: #{tpu_custom_call.1} parent=47 // pred_region
          %342 = dma.done [#allocation9], 256
        $region68: #{tpu_custom_call.1} parent=47 // pred_fallthru
          _
        %s343 = sand.u32 %s36, 1
        %s344 = scalar_lea.sflag [#allocation3], %s343
        %s345 = sand.u32 %s36, 1
        %s346 = smul.addr %s345, 8
        %s347 = scalar_lea.vmem [#allocation2], %s346
        %p348 = pneg %p49
        %p349 = pneg %p46
        %s350 = sand.u32 %s28, 1
        %s351 = scalar_lea.sflag [#allocation6], %s350
        %s352 = sand.u32 %s62, 1
        %s353 = smul.addr %s352, 8
        %s354 = scalar_lea.vmem [#allocation5], %s353
        %p355 = pneg %p75
        %p356 = pneg %p72
        %p357 = pneg %p96
        %p358 = pneg %p93
        %p359 = pneg %p117
        %p360 = pneg %p114
        %p361 = pneg %p138
        %p362 = pneg %p135
        %p363 = pneg %p159
        %p364 = pneg %p156
        %p365 = pneg %p180
        %p366 = pneg %p177
        %p367 = pneg %p206
        %p368 = pneg %p203
        %s369 = sand.u32 %s193, 1
        %s370 = scalar_lea.sflag [#allocation4], %s369
        %s371 = sand.u32 %s193, 1
        %s372 = smul.addr %s371, 8
        %s373 = scalar_lea.vmem [#allocation11], %s372
        %v375 = vld [vmem:[%s317] sm:$0xff]
        %v376 = vpack.c.bf16 %v375, %v375
        %v377 = vld [vmem:[%s326] sm:$0xff]
        %v378 = vpack.c.bf16 %v377, %v377
        %v379 = vld [vmem:[#allocation7] sm:$0xf]
        %v380 = vld [vmem:[#allocation7 + $0x4] sm:$0xf]
        %v381 = vld [vmem:[#allocation7 + $0x8] sm:$0xf]
        %v382 = vld [vmem:[#allocation7 + $0xc] sm:$0xf]
        %v387 = vunpack.c.l.b16 %v379
        %v388 = vunpack.c.l.b16 %v380
        %v389 = vunpack.c.l.b16 %v381
        %v390 = vunpack.c.l.b16 %v382
        %v391 = vpack.c.b16 %v388, %v387
        %v392 = vpack.c.b16 %v390, %v389
        %vm395 = vcmask 261120
        %v397 = vsel %vm395, %v376, 0
        %399 = vmatprep.subr.bf16.mxu0 0
        %400 = vmatpush1.bf16.msra.mxu0 %v391
        %401 = vmatprep.subr.bf16.mxu0 0
        %402 = vmatpush1.bf16.msra.mxu0 %v392
        %403 = vmatprep.subr.bf16.mxu0 0
        %404 = vmatpush1.bf16.msra.mxu0 0
        %405 = vmatprep.subr.bf16.mxu0 0
        %406 = vmatpush1.bf16.msra.mxu0 0
        %407 = vmatprep.subr.bf16.mxu0 0
        %408 = vmatpush1.bf16.msra.mxu0 0
        %409 = vmatprep.subr.bf16.mxu0 0
        %410 = vmatpush1.bf16.msra.mxu0 0
        %411 = vmatprep.subr.bf16.mxu0 0
        %412 = vmatpush1.bf16.msra.mxu0 0
        %413 = vmatprep.subr.bf16.mxu0 0
        %414 = vmatpush1.bf16.msra.mxu0 0
        %415 = vmatprep.subr.bf16.mxu0 0
        %416 = vmatpush1.bf16.msra.mxu0 0
        %417 = vmatprep.subr.bf16.mxu0 0
        %418 = vmatpush1.bf16.msra.mxu0 0
        %419 = vmatprep.subr.bf16.mxu0 0
        %420 = vmatpush1.bf16.msra.mxu0 0
        %421 = vmatprep.subr.bf16.mxu0 0
        %422 = vmatpush1.bf16.msra.mxu0 0
        %423 = vmatprep.subr.bf16.mxu0 0
        %424 = vmatpush1.bf16.msra.mxu0 0
        %425 = vmatprep.subr.bf16.mxu0 0
        %426 = vmatpush1.bf16.msra.mxu0 0
        %427 = vmatprep.subr.bf16.mxu0 0
        %428 = vmatpush1.bf16.msra.mxu0 0
        %429 = vmatprep.subr.bf16.mxu0 0
        %430 = vmatpush1.bf16.msra.mxu0 0
        %431 = vmatprep.mubr.bf16.mxu0 0
        %432 = vmatmul.mubr.bf16.gmra.mrb[0].mxu0 %v397
        %v433 = vpop.f32.mrb[0].mxu0
        %v434 = vadd.f32 0.0, %v433
        %v435 = vpop.f32.mrb[0].mxu0
        %v436 = vpop.f32.mrb[0].mxu0
        %v437 = vpop.f32.mrb[0].mxu0
        %438 = vdwg.mxu0
        %v439 = vld [vmem:[#allocation8] sm:$0xf]
        %v440 = vld [vmem:[#allocation8 + $0x4] sm:$0xf]
        %v441 = vld [vmem:[#allocation8 + $0x8] sm:$0xf]
        %v442 = vld [vmem:[#allocation8 + $0xc] sm:$0xf]
        %v447 = vunpack.c.l.b16 %v439
        %v448 = vunpack.c.l.b16 %v440
        %v449 = vunpack.c.l.b16 %v441
        %v450 = vunpack.c.l.b16 %v442
        %v451 = vpack.c.b16 %v448, %v447
        %v452 = vpack.c.b16 %v450, %v449
        %v456 = vsel %vm395, %v378, 0
        %458 = vmatprep.subr.bf16.mxu0 0
        %459 = vmatpush1.bf16.msra.mxu0 %v451
        %460 = vmatprep.subr.bf16.mxu0 0
        %461 = vmatpush1.bf16.msra.mxu0 %v452
        %462 = vmatprep.subr.bf16.mxu0 0
        %463 = vmatpush1.bf16.msra.mxu0 0
        %464 = vmatprep.subr.bf16.mxu0 0
        %465 = vmatpush1.bf16.msra.mxu0 0
        %466 = vmatprep.subr.bf16.mxu0 0
        %467 = vmatpush1.bf16.msra.mxu0 0
        %468 = vmatprep.subr.bf16.mxu0 0
        %469 = vmatpush1.bf16.msra.mxu0 0
        %470 = vmatprep.subr.bf16.mxu0 0
        %471 = vmatpush1.bf16.msra.mxu0 0
        %472 = vmatprep.subr.bf16.mxu0 0
        %473 = vmatpush1.bf16.msra.mxu0 0
        %474 = vmatprep.subr.bf16.mxu0 0
        %475 = vmatpush1.bf16.msra.mxu0 0
        %476 = vmatprep.subr.bf16.mxu0 0
        %477 = vmatpush1.bf16.msra.mxu0 0
        %478 = vmatprep.subr.bf16.mxu0 0
        %479 = vmatpush1.bf16.msra.mxu0 0
        %480 = vmatprep.subr.bf16.mxu0 0
        %481 = vmatpush1.bf16.msra.mxu0 0
        %482 = vmatprep.subr.bf16.mxu0 0
        %483 = vmatpush1.bf16.msra.mxu0 0
        %484 = vmatprep.subr.bf16.mxu0 0
        %485 = vmatpush1.bf16.msra.mxu0 0
        %486 = vmatprep.subr.bf16.mxu0 0
        %487 = vmatpush1.bf16.msra.mxu0 0
        %488 = vmatprep.subr.bf16.mxu0 0
        %489 = vmatpush1.bf16.msra.mxu0 0
        %490 = vmatprep.mubr.bf16.mxu0 0
        %491 = vmatmul.mubr.bf16.gmra.mrb[0].mxu0 %v456
        %v492 = vpop.f32.mrb[0].mxu0
        %v493 = vadd.f32 0.0, %v492
        %v494 = vpop.f32.mrb[0].mxu0
        %v495 = vpop.f32.mrb[0].mxu0
        %v496 = vpop.f32.mrb[0].mxu0
        %497 = vdwg.mxu0
        %v498 = vld [vmem:[#allocation10] sm:$0xf]
        %v499 = vld [vmem:[#allocation10 + $0x4] sm:$0xf]
        %v500 = vld [vmem:[#allocation10 + $0x8] sm:$0xf]
        %v501 = vld [vmem:[#allocation10 + $0xc] sm:$0xf]
        %v506 = vunpack.c.l.b16 %v498
        %v507 = vunpack.c.l.b16 %v499
        %v508 = vunpack.c.l.b16 %v500
        %v509 = vunpack.c.l.b16 %v501
        %v510 = vpack.c.b16 %v507, %v506
        %v511 = vpack.c.b16 %v509, %v508
        %514 = vmatprep.subr.bf16.mxu0 0
        %515 = vmatpush1.bf16.msra.mxu0 %v510
        %516 = vmatprep.subr.bf16.mxu0 0
        %517 = vmatpush1.bf16.msra.mxu0 %v511
        %518 = vmatprep.subr.bf16.mxu0 0
        %519 = vmatpush1.bf16.msra.mxu0 0
        %520 = vmatprep.subr.bf16.mxu0 0
        %521 = vmatpush1.bf16.msra.mxu0 0
        %522 = vmatprep.subr.bf16.mxu0 0
        %523 = vmatpush1.bf16.msra.mxu0 0
        %524 = vmatprep.subr.bf16.mxu0 0
        %525 = vmatpush1.bf16.msra.mxu0 0
        %526 = vmatprep.subr.bf16.mxu0 0
        %527 = vmatpush1.bf16.msra.mxu0 0
        %528 = vmatprep.subr.bf16.mxu0 0
        %529 = vmatpush1.bf16.msra.mxu0 0
        %530 = vmatprep.subr.bf16.mxu0 0
        %531 = vmatpush1.bf16.msra.mxu0 0
        %532 = vmatprep.subr.bf16.mxu0 0
        %533 = vmatpush1.bf16.msra.mxu0 0
        %534 = vmatprep.subr.bf16.mxu0 0
        %535 = vmatpush1.bf16.msra.mxu0 0
        %536 = vmatprep.subr.bf16.mxu0 0
        %537 = vmatpush1.bf16.msra.mxu0 0
        %538 = vmatprep.subr.bf16.mxu0 0
        %539 = vmatpush1.bf16.msra.mxu0 0
        %540 = vmatprep.subr.bf16.mxu0 0
        %541 = vmatpush1.bf16.msra.mxu0 0
        %542 = vmatprep.subr.bf16.mxu0 0
        %543 = vmatpush1.bf16.msra.mxu0 0
        %544 = vmatprep.subr.bf16.mxu0 0
        %545 = vmatpush1.bf16.msra.mxu0 0
        %546 = vmatprep.mubr.bf16.mxu0 0
        %547 = vmatmul.mubr.bf16.gmra.mrb[0].mxu0 %v456
        %v548 = vpop.f32.mrb[0].mxu0
        %v549 = vadd.f32 0.0, %v548
        %v550 = vpop.f32.mrb[0].mxu0
        %v551 = vpop.f32.mrb[0].mxu0
        %v552 = vpop.f32.mrb[0].mxu0
        %553 = vdwg.mxu0
        %v554 = vpack.c.bf16 %v434, %v434
        %v555 = vpack.c.bf16 %v493, %v493
        %v556 = vpack.c.bf16 %v549, %v549
        %vm557 = vcmask 31744
        %v559 = vsel %vm557, %v554, 0
        %v562 = vsel %vm557, %v555, 0
        %564 = vmatprep.subr.bf16.mxu0 0
        %565 = vmatpush1.bf16.xpose.msra.mxu0 %v562
        %566 = vmatprep.subr.bf16.mxu0 0
        %567 = vmatpush1.bf16.xpose.msra.mxu0 0
        %568 = vmatprep.subr.bf16.mxu0 0
        %569 = vmatpush1.bf16.xpose.msra.mxu0 0
        %570 = vmatprep.subr.bf16.mxu0 0
        %571 = vmatpush1.bf16.xpose.msra.mxu0 0
        %572 = vmatprep.subr.bf16.mxu0 0
        %573 = vmatpush1.bf16.xpose.msra.mxu0 0
        %574 = vmatprep.subr.bf16.mxu0 0
        %575 = vmatpush1.bf16.xpose.msra.mxu0 0
        %576 = vmatprep.subr.bf16.mxu0 0
        %577 = vmatpush1.bf16.xpose.msra.mxu0 0
        %578 = vmatprep.subr.bf16.mxu0 0
        %579 = vmatpush1.bf16.xpose.msra.mxu0 0
        %580 = vmatprep.subr.bf16.mxu0 0
        %581 = vmatpush1.bf16.xpose.msra.mxu0 0
        %582 = vmatprep.subr.bf16.mxu0 0
        %583 = vmatpush1.bf16.xpose.msra.mxu0 0
        %584 = vmatprep.subr.bf16.mxu0 0
        %585 = vmatpush1.bf16.xpose.msra.mxu0 0
        %586 = vmatprep.subr.bf16.mxu0 0
        %587 = vmatpush1.bf16.xpose.msra.mxu0 0
        %588 = vmatprep.subr.bf16.mxu0 0
        %589 = vmatpush1.bf16.xpose.msra.mxu0 0
        %590 = vmatprep.subr.bf16.mxu0 0
        %591 = vmatpush1.bf16.xpose.msra.mxu0 0
        %592 = vmatprep.subr.bf16.mxu0 0
        %593 = vmatpush1.bf16.xpose.msra.mxu0 0
        %594 = vmatprep.subr.bf16.mxu0 0
        %595 = vmatpush1.bf16.xpose.msra.mxu0 0
        %596 = vmatprep.mubr.bf16.mxu0 0
        %597 = vmatmul.mubr.bf16.gmra.mrb[0].mxu0 %v559
        %v598 = vpop.f32.mrb[0].mxu0
        %v599 = vadd.f32 0.0, %v598
        %v600 = vpop.f32.mrb[0].mxu0
        %v601 = vpop.f32.mrb[0].mxu0
        %v602 = vpop.f32.mrb[0].mxu0
        %603 = vdwg.mxu0
        %v604 = vmul.f32 %v599, 0.5
        %vm605 = vcmask 64512
        %v606 = vsel %vm605, %v604, -inf
        %607 = vmax.xlane.f32.xlu0 %v606
        %v608 = vpop.xlane.xlu0 %607
        %v609 = vsub.f32 %v604, %v608
        %v610 = vmul.f32 %v609, 1.442695
        %v611 = vpow.pop %v610
        %v612 = vsel %vm605, %v611, 0.0
        %613 = vadd.xlane.f32.xlu0 %v612
        %v614 = vpop.xlane.xlu0 %613
        %v615 = vrcp.pop %v614
        %v616 = vmul.f32 %v611, %v615
        %v617 = vpack.c.bf16 %v616, %v616
        %v619 = vsel %vm605, %v617, 0
        %vm621 = vcmask 1043456
        %v623 = vsel %vm621, %v556, 0
        %625 = vmatprep.subr.bf16.mxu0 0
        %626 = vmatpush1.bf16.msra.mxu0 %v623
        %627 = vmatprep.subr.bf16.mxu0 0
        %628 = vmatpush1.bf16.msra.mxu0 0
        %629 = vmatprep.subr.bf16.mxu0 0
        %630 = vmatpush1.bf16.msra.mxu0 0
        %631 = vmatprep.subr.bf16.mxu0 0
        %632 = vmatpush1.bf16.msra.mxu0 0
        %633 = vmatprep.subr.bf16.mxu0 0
        %634 = vmatpush1.bf16.msra.mxu0 0
        %635 = vmatprep.subr.bf16.mxu0 0
        %636 = vmatpush1.bf16.msra.mxu0 0
        %637 = vmatprep.subr.bf16.mxu0 0
        %638 = vmatpush1.bf16.msra.mxu0 0
        %639 = vmatprep.subr.bf16.mxu0 0
        %640 = vmatpush1.bf16.msra.mxu0 0
        %641 = vmatprep.subr.bf16.mxu0 0
        %642 = vmatpush1.bf16.msra.mxu0 0
        %643 = vmatprep.subr.bf16.mxu0 0
        %644 = vmatpush1.bf16.msra.mxu0 0
        %645 = vmatprep.subr.bf16.mxu0 0
        %646 = vmatpush1.bf16.msra.mxu0 0
        %647 = vmatprep.subr.bf16.mxu0 0
        %648 = vmatpush1.bf16.msra.mxu0 0
        %649 = vmatprep.subr.bf16.mxu0 0
        %650 = vmatpush1.bf16.msra.mxu0 0
        %651 = vmatprep.subr.bf16.mxu0 0
        %652 = vmatpush1.bf16.msra.mxu0 0
        %653 = vmatprep.subr.bf16.mxu0 0
        %654 = vmatpush1.bf16.msra.mxu0 0
        %655 = vmatprep.subr.bf16.mxu0 0
        %656 = vmatpush1.bf16.msra.mxu0 0
        %657 = vmatprep.mubr.bf16.mxu0 0
        %658 = vmatmul.mubr.bf16.gmra.mrb[0].mxu0 %v619
        %v659 = vpop.f32.mrb[0].mxu0
        %v660 = vadd.f32 0.0, %v659
        %v661 = vpop.f32.mrb[0].mxu0
        %v662 = vpop.f32.mrb[0].mxu0
        %v663 = vpop.f32.mrb[0].mxu0
        %664 = vdwg.mxu0
        %666 = vrot.lane.b32.xlu0 %v554, 124
        %v667 = vpop.permute.xlu0 %666
        %669 = vrot.lane.b32.xlu0 %v555, 124
        %v670 = vpop.permute.xlu0 %669
        %v672 = vsel %vm557, %v667, 0
        %v675 = vsel %vm557, %v670, 0
        %677 = vmatprep.subr.bf16.mxu0 0
        %678 = vmatpush1.bf16.xpose.msra.mxu0 %v675
        %679 = vmatprep.subr.bf16.mxu0 0
        %680 = vmatpush1.bf16.xpose.msra.mxu0 0
        %681 = vmatprep.subr.bf16.mxu0 0
        %682 = vmatpush1.bf16.xpose.msra.mxu0 0
        %683 = vmatprep.subr.bf16.mxu0 0
        %684 = vmatpush1.bf16.xpose.msra.mxu0 0
        %685 = vmatprep.subr.bf16.mxu0 0
        %686 = vmatpush1.bf16.xpose.msra.mxu0 0
        %687 = vmatprep.subr.bf16.mxu0 0
        %688 = vmatpush1.bf16.xpose.msra.mxu0 0
        %689 = vmatprep.subr.bf16.mxu0 0
        %690 = vmatpush1.bf16.xpose.msra.mxu0 0
        %691 = vmatprep.subr.bf16.mxu0 0
        %692 = vmatpush1.bf16.xpose.msra.mxu0 0
        %693 = vmatprep.subr.bf16.mxu0 0
        %694 = vmatpush1.bf16.xpose.msra.mxu0 0
        %695 = vmatprep.subr.bf16.mxu0 0
        %696 = vmatpush1.bf16.xpose.msra.mxu0 0
        %697 = vmatprep.subr.bf16.mxu0 0
        %698 = vmatpush1.bf16.xpose.msra.mxu0 0
        %699 = vmatprep.subr.bf16.mxu0 0
        %700 = vmatpush1.bf16.xpose.msra.mxu0 0
        %701 = vmatprep.subr.bf16.mxu0 0
        %702 = vmatpush1.bf16.xpose.msra.mxu0 0
        %703 = vmatprep.subr.bf16.mxu0 0
        %704 = vmatpush1.bf16.xpose.msra.mxu0 0
        %705 = vmatprep.subr.bf16.mxu0 0
        %706 = vmatpush1.bf16.xpose.msra.mxu0 0
        %707 = vmatprep.subr.bf16.mxu0 0
        %708 = vmatpush1.bf16.xpose.msra.mxu0 0
        %709 = vmatprep.mubr.bf16.mxu0 0
        %710 = vmatmul.mubr.bf16.gmra.mrb[0].mxu0 %v672
        %v711 = vpop.f32.mrb[0].mxu0
        %v712 = vadd.f32 0.0, %v711
        %v713 = vpop.f32.mrb[0].mxu0
        %v714 = vpop.f32.mrb[0].mxu0
        %v715 = vpop.f32.mrb[0].mxu0
        %716 = vdwg.mxu0
        %v717 = vmul.f32 %v712, 0.5
        %v718 = vsel %vm605, %v717, -inf
        %719 = vmax.xlane.f32.xlu0 %v718
        %v720 = vpop.xlane.xlu0 %719
        %v721 = vsub.f32 %v717, %v720
        %v722 = vmul.f32 %v721, 1.442695
        %v723 = vpow.pop %v722
        %v724 = vsel %vm605, %v723, 0.0
        %725 = vadd.xlane.f32.xlu0 %v724
        %v726 = vpop.xlane.xlu0 %725
        %v727 = vrcp.pop %v726
        %v728 = vmul.f32 %v723, %v727
        %v729 = vpack.c.bf16 %v728, %v728
        %731 = vrot.lane.b32.xlu0 %v556, 124
        %v732 = vpop.permute.xlu0 %731
        %v734 = vsel %vm605, %v729, 0
        %v737 = vsel %vm621, %v732, 0
        %739 = vmatprep.subr.bf16.mxu0 0
        %740 = vmatpush1.bf16.msra.mxu0 %v737
        %741 = vmatprep.subr.bf16.mxu0 0
        %742 = vmatpush1.bf16.msra.mxu0 0
        %743 = vmatprep.subr.bf16.mxu0 0
        %744 = vmatpush1.bf16.msra.mxu0 0
        %745 = vmatprep.subr.bf16.mxu0 0
        %746 = vmatpush1.bf16.msra.mxu0 0
        %747 = vmatprep.subr.bf16.mxu0 0
        %748 = vmatpush1.bf16.msra.mxu0 0
        %749 = vmatprep.subr.bf16.mxu0 0
        %750 = vmatpush1.bf16.msra.mxu0 0
        %751 = vmatprep.subr.bf16.mxu0 0
        %752 = vmatpush1.bf16.msra.mxu0 0
        %753 = vmatprep.subr.bf16.mxu0 0
        %754 = vmatpush1.bf16.msra.mxu0 0
        %755 = vmatprep.subr.bf16.mxu0 0
        %756 = vmatpush1.bf16.msra.mxu0 0
        %757 = vmatprep.subr.bf16.mxu0 0
        %758 = vmatpush1.bf16.msra.mxu0 0
        %759 = vmatprep.subr.bf16.mxu0 0
        %760 = vmatpush1.bf16.msra.mxu0 0
        %761 = vmatprep.subr.bf16.mxu0 0
        %762 = vmatpush1.bf16.msra.mxu0 0
        %763 = vmatprep.subr.bf16.mxu0 0
        %764 = vmatpush1.bf16.msra.mxu0 0
        %765 = vmatprep.subr.bf16.mxu0 0
        %766 = vmatpush1.bf16.msra.mxu0 0
        %767 = vmatprep.subr.bf16.mxu0 0
        %768 = vmatpush1.bf16.msra.mxu0 0
        %769 = vmatprep.subr.bf16.mxu0 0
        %770 = vmatpush1.bf16.msra.mxu0 0
        %771 = vmatprep.mubr.bf16.mxu0 0
        %772 = vmatmul.mubr.bf16.gmra.mrb[0].mxu0 %v734
        %v773 = vpop.f32.mrb[0].mxu0
        %v774 = vadd.f32 0.0, %v773
        %v775 = vpop.f32.mrb[0].mxu0
        %v776 = vpop.f32.mrb[0].mxu0
        %v777 = vpop.f32.mrb[0].mxu0
        %778 = vdwg.mxu0
        %779 = vrot.lane.b32.xlu0 %v554, 120
        %v780 = vpop.permute.xlu0 %779
        %781 = vrot.lane.b32.xlu0 %v555, 120
        %v782 = vpop.permute.xlu0 %781
        %v784 = vsel %vm557, %v780, 0
        %v787 = vsel %vm557, %v782, 0
        %789 = vmatprep.subr.bf16.mxu0 0
        %790 = vmatpush1.bf16.xpose.msra.mxu0 %v787
        %791 = vmatprep.subr.bf16.mxu0 0
        %792 = vmatpush1.bf16.xpose.msra.mxu0 0
        %793 = vmatprep.subr.bf16.mxu0 0
        %794 = vmatpush1.bf16.xpose.msra.mxu0 0
        %795 = vmatprep.subr.bf16.mxu0 0
        %796 = vmatpush1.bf16.xpose.msra.mxu0 0
        %797 = vmatprep.subr.bf16.mxu0 0
        %798 = vmatpush1.bf16.xpose.msra.mxu0 0
        %799 = vmatprep.subr.bf16.mxu0 0
        %800 = vmatpush1.bf16.xpose.msra.mxu0 0
        %801 = vmatprep.subr.bf16.mxu0 0
        %802 = vmatpush1.bf16.xpose.msra.mxu0 0
        %803 = vmatprep.subr.bf16.mxu0 0
        %804 = vmatpush1.bf16.xpose.msra.mxu0 0
        %805 = vmatprep.subr.bf16.mxu0 0
        %806 = vmatpush1.bf16.xpose.msra.mxu0 0
        %807 = vmatprep.subr.bf16.mxu0 0
        %808 = vmatpush1.bf16.xpose.msra.mxu0 0
        %809 = vmatprep.subr.bf16.mxu0 0
        %810 = vmatpush1.bf16.xpose.msra.mxu0 0
        %811 = vmatprep.subr.bf16.mxu0 0
        %812 = vmatpush1.bf16.xpose.msra.mxu0 0
        %813 = vmatprep.subr.bf16.mxu0 0
        %814 = vmatpush1.bf16.xpose.msra.mxu0 0
        %815 = vmatprep.subr.bf16.mxu0 0
        %816 = vmatpush1.bf16.xpose.msra.mxu0 0
        %817 = vmatprep.subr.bf16.mxu0 0
        %818 = vmatpush1.bf16.xpose.msra.mxu0 0
        %819 = vmatprep.subr.bf16.mxu0 0
        %820 = vmatpush1.bf16.xpose.msra.mxu0 0
        %821 = vmatprep.mubr.bf16.mxu0 0
        %822 = vmatmul.mubr.bf16.gmra.mrb[0].mxu0 %v784
        %v823 = vpop.f32.mrb[0].mxu0
        %v824 = vadd.f32 0.0, %v823
        %v825 = vpop.f32.mrb[0].mxu0
        %v826 = vpop.f32.mrb[0].mxu0
        %v827 = vpop.f32.mrb[0].mxu0
        %828 = vdwg.mxu0
        %v829 = vmul.f32 %v824, 0.5
        %v830 = vsel %vm605, %v829, -inf
        %831 = vmax.xlane.f32.xlu0 %v830
        %v832 = vpop.xlane.xlu0 %831
        %v833 = vsub.f32 %v829, %v832
        %v834 = vmul.f32 %v833, 1.442695
        %v835 = vpow.pop %v834
        %v836 = vsel %vm605, %v835, 0.0
        %837 = vadd.xlane.f32.xlu0 %v836
        %v838 = vpop.xlane.xlu0 %837
        %v839 = vrcp.pop %v838
        %v840 = vmul.f32 %v835, %v839
        %v841 = vpack.c.bf16 %v840, %v840
        %842 = vrot.lane.b32.xlu0 %v556, 120
        %v843 = vpop.permute.xlu0 %842
        %v845 = vsel %vm605, %v841, 0
        %v848 = vsel %vm621, %v843, 0
        %850 = vmatprep.subr.bf16.mxu0 0
        %851 = vmatpush1.bf16.msra.mxu0 %v848
        %852 = vmatprep.subr.bf16.mxu0 0
        %853 = vmatpush1.bf16.msra.mxu0 0
        %854 = vmatprep.subr.bf16.mxu0 0
        %855 = vmatpush1.bf16.msra.mxu0 0
        %856 = vmatprep.subr.bf16.mxu0 0
        %857 = vmatpush1.bf16.msra.mxu0 0
        %858 = vmatprep.subr.bf16.mxu0 0
        %859 = vmatpush1.bf16.msra.mxu0 0
        %860 = vmatprep.subr.bf16.mxu0 0
        %861 = vmatpush1.bf16.msra.mxu0 0
        %862 = vmatprep.subr.bf16.mxu0 0
        %863 = vmatpush1.bf16.msra.mxu0 0
        %864 = vmatprep.subr.bf16.mxu0 0
        %865 = vmatpush1.bf16.msra.mxu0 0
        %866 = vmatprep.subr.bf16.mxu0 0
        %867 = vmatpush1.bf16.msra.mxu0 0
        %868 = vmatprep.subr.bf16.mxu0 0
        %869 = vmatpush1.bf16.msra.mxu0 0
        %870 = vmatprep.subr.bf16.mxu0 0
        %871 = vmatpush1.bf16.msra.mxu0 0
        %872 = vmatprep.subr.bf16.mxu0 0
        %873 = vmatpush1.bf16.msra.mxu0 0
        %874 = vmatprep.subr.bf16.mxu0 0
        %875 = vmatpush1.bf16.msra.mxu0 0
        %876 = vmatprep.subr.bf16.mxu0 0
        %877 = vmatpush1.bf16.msra.mxu0 0
        %878 = vmatprep.subr.bf16.mxu0 0
        %879 = vmatpush1.bf16.msra.mxu0 0
        %880 = vmatprep.subr.bf16.mxu0 0
        %881 = vmatpush1.bf16.msra.mxu0 0
        %882 = vmatprep.mubr.bf16.mxu0 0
        %883 = vmatmul.mubr.bf16.gmra.mrb[0].mxu0 %v845
        %v884 = vpop.f32.mrb[0].mxu0
        %v885 = vadd.f32 0.0, %v884
        %v886 = vpop.f32.mrb[0].mxu0
        %v887 = vpop.f32.mrb[0].mxu0
        %v888 = vpop.f32.mrb[0].mxu0
        %889 = vdwg.mxu0
        %890 = vrot.lane.b32.xlu0 %v554, 116
        %v891 = vpop.permute.xlu0 %890
        %892 = vrot.lane.b32.xlu0 %v555, 116
        %v893 = vpop.permute.xlu0 %892
        %v895 = vsel %vm557, %v891, 0
        %v898 = vsel %vm557, %v893, 0
        %900 = vmatprep.subr.bf16.mxu0 0
        %901 = vmatpush1.bf16.xpose.msra.mxu0 %v898
        %902 = vmatprep.subr.bf16.mxu0 0
        %903 = vmatpush1.bf16.xpose.msra.mxu0 0
        %904 = vmatprep.subr.bf16.mxu0 0
        %905 = vmatpush1.bf16.xpose.msra.mxu0 0
        %906 = vmatprep.subr.bf16.mxu0 0
        %907 = vmatpush1.bf16.xpose.msra.mxu0 0
        %908 = vmatprep.subr.bf16.mxu0 0
        %909 = vmatpush1.bf16.xpose.msra.mxu0 0
        %910 = vmatprep.subr.bf16.mxu0 0
        %911 = vmatpush1.bf16.xpose.msra.mxu0 0
        %912 = vmatprep.subr.bf16.mxu0 0
        %913 = vmatpush1.bf16.xpose.msra.mxu0 0
        %914 = vmatprep.subr.bf16.mxu0 0
        %915 = vmatpush1.bf16.xpose.msra.mxu0 0
        %916 = vmatprep.subr.bf16.mxu0 0
        %917 = vmatpush1.bf16.xpose.msra.mxu0 0
        %918 = vmatprep.subr.bf16.mxu0 0
        %919 = vmatpush1.bf16.xpose.msra.mxu0 0
        %920 = vmatprep.subr.bf16.mxu0 0
        %921 = vmatpush1.bf16.xpose.msra.mxu0 0
        %922 = vmatprep.subr.bf16.mxu0 0
        %923 = vmatpush1.bf16.xpose.msra.mxu0 0
        %924 = vmatprep.subr.bf16.mxu0 0
        %925 = vmatpush1.bf16.xpose.msra.mxu0 0
        %926 = vmatprep.subr.bf16.mxu0 0
        %927 = vmatpush1.bf16.xpose.msra.mxu0 0
        %928 = vmatprep.subr.bf16.mxu0 0
        %929 = vmatpush1.bf16.xpose.msra.mxu0 0
        %930 = vmatprep.subr.bf16.mxu0 0
        %931 = vmatpush1.bf16.xpose.msra.mxu0 0
        %932 = vmatprep.mubr.bf16.mxu0 0
        %933 = vmatmul.mubr.bf16.gmra.mrb[0].mxu0 %v895
        %v934 = vpop.f32.mrb[0].mxu0
        %v935 = vadd.f32 0.0, %v934
        %v936 = vpop.f32.mrb[0].mxu0
        %v937 = vpop.f32.mrb[0].mxu0
        %v938 = vpop.f32.mrb[0].mxu0
        %939 = vdwg.mxu0
        %v940 = vmul.f32 %v935, 0.5
        %v941 = vsel %vm605, %v940, -inf
        %942 = vmax.xlane.f32.xlu0 %v941
        %v943 = vpop.xlane.xlu0 %942
        %v944 = vsub.f32 %v940, %v943
        %v945 = vmul.f32 %v944, 1.442695
        %v946 = vpow.pop %v945
        %v947 = vsel %vm605, %v946, 0.0
        %948 = vadd.xlane.f32.xlu0 %v947
        %v949 = vpop.xlane.xlu0 %948
        %v950 = vrcp.pop %v949
        %v951 = vmul.f32 %v946, %v950
        %v952 = vpack.c.bf16 %v951, %v951
        %953 = vrot.lane.b32.xlu0 %v556, 116
        %v954 = vpop.permute.xlu0 %953
        %v956 = vsel %vm605, %v952, 0
        %v959 = vsel %vm621, %v954, 0
        %961 = vmatprep.subr.bf16.mxu0 0
        %962 = vmatpush1.bf16.msra.mxu0 %v959
        %963 = vmatprep.subr.bf16.mxu0 0
        %964 = vmatpush1.bf16.msra.mxu0 0
        %965 = vmatprep.subr.bf16.mxu0 0
        %966 = vmatpush1.bf16.msra.mxu0 0
        %967 = vmatprep.subr.bf16.mxu0 0
        %968 = vmatpush1.bf16.msra.mxu0 0
        %969 = vmatprep.subr.bf16.mxu0 0
        %970 = vmatpush1.bf16.msra.mxu0 0
        %971 = vmatprep.subr.bf16.mxu0 0
        %972 = vmatpush1.bf16.msra.mxu0 0
        %973 = vmatprep.subr.bf16.mxu0 0
        %974 = vmatpush1.bf16.msra.mxu0 0
        %975 = vmatprep.subr.bf16.mxu0 0
        %976 = vmatpush1.bf16.msra.mxu0 0
        %977 = vmatprep.subr.bf16.mxu0 0
        %978 = vmatpush1.bf16.msra.mxu0 0
        %979 = vmatprep.subr.bf16.mxu0 0
        %980 = vmatpush1.bf16.msra.mxu0 0
        %981 = vmatprep.subr.bf16.mxu0 0
        %982 = vmatpush1.bf16.msra.mxu0 0
        %983 = vmatprep.subr.bf16.mxu0 0
        %984 = vmatpush1.bf16.msra.mxu0 0
        %985 = vmatprep.subr.bf16.mxu0 0
        %986 = vmatpush1.bf16.msra.mxu0 0
        %987 = vmatprep.subr.bf16.mxu0 0
        %988 = vmatpush1.bf16.msra.mxu0 0
        %989 = vmatprep.subr.bf16.mxu0 0
        %990 = vmatpush1.bf16.msra.mxu0 0
        %991 = vmatprep.subr.bf16.mxu0 0
        %992 = vmatpush1.bf16.msra.mxu0 0
        %993 = vmatprep.mubr.bf16.mxu0 0
        %994 = vmatmul.mubr.bf16.gmra.mrb[0].mxu0 %v956
        %v995 = vpop.f32.mrb[0].mxu0
        %v996 = vadd.f32 0.0, %v995
        %v997 = vpop.f32.mrb[0].mxu0
        %v998 = vpop.f32.mrb[0].mxu0
        %v999 = vpop.f32.mrb[0].mxu0
        %1000 = vdwg.mxu0
        %1001 = vrot.lane.b32.xlu0 %v554, 112
        %v1002 = vpop.permute.xlu0 %1001
        %1003 = vrot.lane.b32.xlu0 %v555, 112
        %v1004 = vpop.permute.xlu0 %1003
        %v1006 = vsel %vm557, %v1002, 0
        %v1009 = vsel %vm557, %v1004, 0
        %1011 = vmatprep.subr.bf16.mxu0 0
        %1012 = vmatpush1.bf16.xpose.msra.mxu0 %v1009
        %1013 = vmatprep.subr.bf16.mxu0 0
        %1014 = vmatpush1.bf16.xpose.msra.mxu0 0
        %1015 = vmatprep.subr.bf16.mxu0 0
        %1016 = vmatpush1.bf16.xpose.msra.mxu0 0
        %1017 = vmatprep.subr.bf16.mxu0 0
        %1018 = vmatpush1.bf16.xpose.msra.mxu0 0
        %1019 = vmatprep.subr.bf16.mxu0 0
        %1020 = vmatpush1.bf16.xpose.msra.mxu0 0
        %1021 = vmatprep.subr.bf16.mxu0 0
        %1022 = vmatpush1.bf16.xpose.msra.mxu0 0
        %1023 = vmatprep.subr.bf16.mxu0 0
        %1024 = vmatpush1.bf16.xpose.msra.mxu0 0
        %1025 = vmatprep.subr.bf16.mxu0 0
        %1026 = vmatpush1.bf16.xpose.msra.mxu0 0
        %1027 = vmatprep.subr.bf16.mxu0 0
        %1028 = vmatpush1.bf16.xpose.msra.mxu0 0
        %1029 = vmatprep.subr.bf16.mxu0 0
        %1030 = vmatpush1.bf16.xpose.msra.mxu0 0
        %1031 = vmatprep.subr.bf16.mxu0 0
        %1032 = vmatpush1.bf16.xpose.msra.mxu0 0
        %1033 = vmatprep.subr.bf16.mxu0 0
        %1034 = vmatpush1.bf16.xpose.msra.mxu0 0
        %1035 = vmatprep.subr.bf16.mxu0 0
        %1036 = vmatpush1.bf16.xpose.msra.mxu0 0
        %1037 = vmatprep.subr.bf16.mxu0 0
        %1038 = vmatpush1.bf16.xpose.msra.mxu0 0
        %1039 = vmatprep.subr.bf16.mxu0 0
        %1040 = vmatpush1.bf16.xpose.msra.mxu0 0
        %1041 = vmatprep.subr.bf16.mxu0 0
        %1042 = vmatpush1.bf16.xpose.msra.mxu0 0
        %1043 = vmatprep.mubr.bf16.mxu0 0
        %1044 = vmatmul.mubr.bf16.gmra.mrb[0].mxu0 %v1006
        %v1045 = vpop.f32.mrb[0].mxu0
        %v1046 = vadd.f32 0.0, %v1045
        %v1047 = vpop.f32.mrb[0].mxu0
        %v1048 = vpop.f32.mrb[0].mxu0
        %v1049 = vpop.f32.mrb[0].mxu0
        %1050 = vdwg.mxu0
        %v1051 = vmul.f32 %v1046, 0.5
        %v1052 = vsel %vm605, %v1051, -inf
        %1053 = vmax.xlane.f32.xlu0 %v1052
        %v1054 = vpop.xlane.xlu0 %1053
        %v1055 = vsub.f32 %v1051, %v1054
        %v1056 = vmul.f32 %v1055, 1.442695
        %v1057 = vpow.pop %v1056
        %v1058 = vsel %vm605, %v1057, 0.0
        %1059 = vadd.xlane.f32.xlu0 %v1058
        %v1060 = vpop.xlane.xlu0 %1059
        %v1061 = vrcp.pop %v1060
        %v1062 = vmul.f32 %v1057, %v1061
        %v1063 = vpack.c.bf16 %v1062, %v1062
        %1064 = vrot.lane.b32.xlu0 %v556, 112
        %v1065 = vpop.permute.xlu0 %1064
        %v1067 = vsel %vm605, %v1063, 0
        %v1070 = vsel %vm621, %v1065, 0
        %1072 = vmatprep.subr.bf16.mxu0 0
        %1073 = vmatpush1.bf16.msra.mxu0 %v1070
        %1074 = vmatprep.subr.bf16.mxu0 0
        %1075 = vmatpush1.bf16.msra.mxu0 0
        %1076 = vmatprep.subr.bf16.mxu0 0
        %1077 = vmatpush1.bf16.msra.mxu0 0
        %1078 = vmatprep.subr.bf16.mxu0 0
        %1079 = vmatpush1.bf16.msra.mxu0 0
        %1080 = vmatprep.subr.bf16.mxu0 0
        %1081 = vmatpush1.bf16.msra.mxu0 0
        %1082 = vmatprep.subr.bf16.mxu0 0
        %1083 = vmatpush1.bf16.msra.mxu0 0
        %1084 = vmatprep.subr.bf16.mxu0 0
        %1085 = vmatpush1.bf16.msra.mxu0 0
        %1086 = vmatprep.subr.bf16.mxu0 0
        %1087 = vmatpush1.bf16.msra.mxu0 0
        %1088 = vmatprep.subr.bf16.mxu0 0
        %1089 = vmatpush1.bf16.msra.mxu0 0
        %1090 = vmatprep.subr.bf16.mxu0 0
        %1091 = vmatpush1.bf16.msra.mxu0 0
        %1092 = vmatprep.subr.bf16.mxu0 0
        %1093 = vmatpush1.bf16.msra.mxu0 0
        %1094 = vmatprep.subr.bf16.mxu0 0
        %1095 = vmatpush1.bf16.msra.mxu0 0
        %1096 = vmatprep.subr.bf16.mxu0 0
        %1097 = vmatpush1.bf16.msra.mxu0 0
        %1098 = vmatprep.subr.bf16.mxu0 0
        %1099 = vmatpush1.bf16.msra.mxu0 0
        %1100 = vmatprep.subr.bf16.mxu0 0
        %1101 = vmatpush1.bf16.msra.mxu0 0
        %1102 = vmatprep.subr.bf16.mxu0 0
        %1103 = vmatpush1.bf16.msra.mxu0 0
        %1104 = vmatprep.mubr.bf16.mxu0 0
        %1105 = vmatmul.mubr.bf16.gmra.mrb[0].mxu0 %v1067
        %v1106 = vpop.f32.mrb[0].mxu0
        %v1107 = vadd.f32 0.0, %v1106
        %v1108 = vpop.f32.mrb[0].mxu0
        %v1109 = vpop.f32.mrb[0].mxu0
        %v1110 = vpop.f32.mrb[0].mxu0
        %1111 = vdwg.mxu0
        %1112 = vrot.lane.b32.xlu0 %v554, 108
        %v1113 = vpop.permute.xlu0 %1112
        %1114 = vrot.lane.b32.xlu0 %v555, 108
        %v1115 = vpop.permute.xlu0 %1114
        %v1117 = vsel %vm557, %v1113, 0
        %v1120 = vsel %vm557, %v1115, 0
        %1122 = vmatprep.subr.bf16.mxu0 0
        %1123 = vmatpush1.bf16.xpose.msra.mxu0 %v1120
        %1124 = vmatprep.subr.bf16.mxu0 0
        %1125 = vmatpush1.bf16.xpose.msra.mxu0 0
        %1126 = vmatprep.subr.bf16.mxu0 0
        %1127 = vmatpush1.bf16.xpose.msra.mxu0 0
        %1128 = vmatprep.subr.bf16.mxu0 0
        %1129 = vmatpush1.bf16.xpose.msra.mxu0 0
        %1130 = vmatprep.subr.bf16.mxu0 0
        %1131 = vmatpush1.bf16.xpose.msra.mxu0 0
        %1132 = vmatprep.subr.bf16.mxu0 0
        %1133 = vmatpush1.bf16.xpose.msra.mxu0 0
        %1134 = vmatprep.subr.bf16.mxu0 0
        %1135 = vmatpush1.bf16.xpose.msra.mxu0 0
        %1136 = vmatprep.subr.bf16.mxu0 0
        %1137 = vmatpush1.bf16.xpose.msra.mxu0 0
        %1138 = vmatprep.subr.bf16.mxu0 0
        %1139 = vmatpush1.bf16.xpose.msra.mxu0 0
        %1140 = vmatprep.subr.bf16.mxu0 0
        %1141 = vmatpush1.bf16.xpose.msra.mxu0 0
        %1142 = vmatprep.subr.bf16.mxu0 0
        %1143 = vmatpush1.bf16.xpose.msra.mxu0 0
        %1144 = vmatprep.subr.bf16.mxu0 0
        %1145 = vmatpush1.bf16.xpose.msra.mxu0 0
        %1146 = vmatprep.subr.bf16.mxu0 0
        %1147 = vmatpush1.bf16.xpose.msra.mxu0 0
        %1148 = vmatprep.subr.bf16.mxu0 0
        %1149 = vmatpush1.bf16.xpose.msra.mxu0 0
        %1150 = vmatprep.subr.bf16.mxu0 0
        %1151 = vmatpush1.bf16.xpose.msra.mxu0 0
        %1152 = vmatprep.subr.bf16.mxu0 0
        %1153 = vmatpush1.bf16.xpose.msra.mxu0 0
        %1154 = vmatprep.mubr.bf16.mxu0 0
        %1155 = vmatmul.mubr.bf16.gmra.mrb[0].mxu0 %v1117
        %v1156 = vpop.f32.mrb[0].mxu0
        %v1157 = vadd.f32 0.0, %v1156
        %v1158 = vpop.f32.mrb[0].mxu0
        %v1159 = vpop.f32.mrb[0].mxu0
        %v1160 = vpop.f32.mrb[0].mxu0
        %1161 = vdwg.mxu0
        %v1162 = vmul.f32 %v1157, 0.5
        %v1163 = vsel %vm605, %v1162, -inf
        %1164 = vmax.xlane.f32.xlu0 %v1163
        %v1165 = vpop.xlane.xlu0 %1164
        %v1166 = vsub.f32 %v1162, %v1165
        %v1167 = vmul.f32 %v1166, 1.442695
        %v1168 = vpow.pop %v1167
        %v1169 = vsel %vm605, %v1168, 0.0
        %1170 = vadd.xlane.f32.xlu0 %v1169
        %v1171 = vpop.xlane.xlu0 %1170
        %v1172 = vrcp.pop %v1171
        %v1173 = vmul.f32 %v1168, %v1172
        %v1174 = vpack.c.bf16 %v1173, %v1173
        %1175 = vrot.lane.b32.xlu0 %v556, 108
        %v1176 = vpop.permute.xlu0 %1175
        %v1178 = vsel %vm605, %v1174, 0
        %v1181 = vsel %vm621, %v1176, 0
        %1183 = vmatprep.subr.bf16.mxu0 0
        %1184 = vmatpush1.bf16.msra.mxu0 %v1181
        %1185 = vmatprep.subr.bf16.mxu0 0
        %1186 = vmatpush1.bf16.msra.mxu0 0
        %1187 = vmatprep.subr.bf16.mxu0 0
        %1188 = vmatpush1.bf16.msra.mxu0 0
        %1189 = vmatprep.subr.bf16.mxu0 0
        %1190 = vmatpush1.bf16.msra.mxu0 0
        %1191 = vmatprep.subr.bf16.mxu0 0
        %1192 = vmatpush1.bf16.msra.mxu0 0
        %1193 = vmatprep.subr.bf16.mxu0 0
        %1194 = vmatpush1.bf16.msra.mxu0 0
        %1195 = vmatprep.subr.bf16.mxu0 0
        %1196 = vmatpush1.bf16.msra.mxu0 0
        %1197 = vmatprep.subr.bf16.mxu0 0
        %1198 = vmatpush1.bf16.msra.mxu0 0
        %1199 = vmatprep.subr.bf16.mxu0 0
        %1200 = vmatpush1.bf16.msra.mxu0 0
        %1201 = vmatprep.subr.bf16.mxu0 0
        %1202 = vmatpush1.bf16.msra.mxu0 0
        %1203 = vmatprep.subr.bf16.mxu0 0
        %1204 = vmatpush1.bf16.msra.mxu0 0
        %1205 = vmatprep.subr.bf16.mxu0 0
        %1206 = vmatpush1.bf16.msra.mxu0 0
        %1207 = vmatprep.subr.bf16.mxu0 0
        %1208 = vmatpush1.bf16.msra.mxu0 0
        %1209 = vmatprep.subr.bf16.mxu0 0
        %1210 = vmatpush1.bf16.msra.mxu0 0
        %1211 = vmatprep.subr.bf16.mxu0 0
        %1212 = vmatpush1.bf16.msra.mxu0 0
        %1213 = vmatprep.subr.bf16.mxu0 0
        %1214 = vmatpush1.bf16.msra.mxu0 0
        %1215 = vmatprep.mubr.bf16.mxu0 0
        %1216 = vmatmul.mubr.bf16.gmra.mrb[0].mxu0 %v1178
        %v1217 = vpop.f32.mrb[0].mxu0
        %v1218 = vadd.f32 0.0, %v1217
        %v1219 = vpop.f32.mrb[0].mxu0
        %v1220 = vpop.f32.mrb[0].mxu0
        %v1221 = vpop.f32.mrb[0].mxu0
        %1222 = vdwg.mxu0
        %1223 = vrot.lane.b32.xlu0 %v554, 104
        %v1224 = vpop.permute.xlu0 %1223
        %1225 = vrot.lane.b32.xlu0 %v555, 104
        %v1226 = vpop.permute.xlu0 %1225
        %v1228 = vsel %vm557, %v1224, 0
        %v1231 = vsel %vm557, %v1226, 0
        %1233 = vmatprep.subr.bf16.mxu0 0
        %1234 = vmatpush1.bf16.xpose.msra.mxu0 %v1231
        %1235 = vmatprep.subr.bf16.mxu0 0
        %1236 = vmatpush1.bf16.xpose.msra.mxu0 0
        %1237 = vmatprep.subr.bf16.mxu0 0
        %1238 = vmatpush1.bf16.xpose.msra.mxu0 0
        %1239 = vmatprep.subr.bf16.mxu0 0
        %1240 = vmatpush1.bf16.xpose.msra.mxu0 0
        %1241 = vmatprep.subr.bf16.mxu0 0
        %1242 = vmatpush1.bf16.xpose.msra.mxu0 0
        %1243 = vmatprep.subr.bf16.mxu0 0
        %1244 = vmatpush1.bf16.xpose.msra.mxu0 0
        %1245 = vmatprep.subr.bf16.mxu0 0
        %1246 = vmatpush1.bf16.xpose.msra.mxu0 0
        %1247 = vmatprep.subr.bf16.mxu0 0
        %1248 = vmatpush1.bf16.xpose.msra.mxu0 0
        %1249 = vmatprep.subr.bf16.mxu0 0
        %1250 = vmatpush1.bf16.xpose.msra.mxu0 0
        %1251 = vmatprep.subr.bf16.mxu0 0
        %1252 = vmatpush1.bf16.xpose.msra.mxu0 0
        %1253 = vmatprep.subr.bf16.mxu0 0
        %1254 = vmatpush1.bf16.xpose.msra.mxu0 0
        %1255 = vmatprep.subr.bf16.mxu0 0
        %1256 = vmatpush1.bf16.xpose.msra.mxu0 0
        %1257 = vmatprep.subr.bf16.mxu0 0
        %1258 = vmatpush1.bf16.xpose.msra.mxu0 0
        %1259 = vmatprep.subr.bf16.mxu0 0
        %1260 = vmatpush1.bf16.xpose.msra.mxu0 0
        %1261 = vmatprep.subr.bf16.mxu0 0
        %1262 = vmatpush1.bf16.xpose.msra.mxu0 0
        %1263 = vmatprep.subr.bf16.mxu0 0
        %1264 = vmatpush1.bf16.xpose.msra.mxu0 0
        %1265 = vmatprep.mubr.bf16.mxu0 0
        %1266 = vmatmul.mubr.bf16.gmra.mrb[0].mxu0 %v1228
        %v1267 = vpop.f32.mrb[0].mxu0
        %v1268 = vadd.f32 0.0, %v1267
        %v1269 = vpop.f32.mrb[0].mxu0
        %v1270 = vpop.f32.mrb[0].mxu0
        %v1271 = vpop.f32.mrb[0].mxu0
        %1272 = vdwg.mxu0
        %v1273 = vmul.f32 %v1268, 0.5
        %v1274 = vsel %vm605, %v1273, -inf
        %1275 = vmax.xlane.f32.xlu0 %v1274
        %v1276 = vpop.xlane.xlu0 %1275
        %v1277 = vsub.f32 %v1273, %v1276
        %v1278 = vmul.f32 %v1277, 1.442695
        %v1279 = vpow.pop %v1278
        %v1280 = vsel %vm605, %v1279, 0.0
        %1281 = vadd.xlane.f32.xlu0 %v1280
        %v1282 = vpop.xlane.xlu0 %1281
        %v1283 = vrcp.pop %v1282
        %v1284 = vmul.f32 %v1279, %v1283
        %v1285 = vpack.c.bf16 %v1284, %v1284
        %1286 = vrot.lane.b32.xlu0 %v556, 104
        %v1287 = vpop.permute.xlu0 %1286
        %v1289 = vsel %vm605, %v1285, 0
        %v1292 = vsel %vm621, %v1287, 0
        %1294 = vmatprep.subr.bf16.mxu0 0
        %1295 = vmatpush1.bf16.msra.mxu0 %v1292
        %1296 = vmatprep.subr.bf16.mxu0 0
        %1297 = vmatpush1.bf16.msra.mxu0 0
        %1298 = vmatprep.subr.bf16.mxu0 0
        %1299 = vmatpush1.bf16.msra.mxu0 0
        %1300 = vmatprep.subr.bf16.mxu0 0
        %1301 = vmatpush1.bf16.msra.mxu0 0
        %1302 = vmatprep.subr.bf16.mxu0 0
        %1303 = vmatpush1.bf16.msra.mxu0 0
        %1304 = vmatprep.subr.bf16.mxu0 0
        %1305 = vmatpush1.bf16.msra.mxu0 0
        %1306 = vmatprep.subr.bf16.mxu0 0
        %1307 = vmatpush1.bf16.msra.mxu0 0
        %1308 = vmatprep.subr.bf16.mxu0 0
        %1309 = vmatpush1.bf16.msra.mxu0 0
        %1310 = vmatprep.subr.bf16.mxu0 0
        %1311 = vmatpush1.bf16.msra.mxu0 0
        %1312 = vmatprep.subr.bf16.mxu0 0
        %1313 = vmatpush1.bf16.msra.mxu0 0
        %1314 = vmatprep.subr.bf16.mxu0 0
        %1315 = vmatpush1.bf16.msra.mxu0 0
        %1316 = vmatprep.subr.bf16.mxu0 0
        %1317 = vmatpush1.bf16.msra.mxu0 0
        %1318 = vmatprep.subr.bf16.mxu0 0
        %1319 = vmatpush1.bf16.msra.mxu0 0
        %1320 = vmatprep.subr.bf16.mxu0 0
        %1321 = vmatpush1.bf16.msra.mxu0 0
        %1322 = vmatprep.subr.bf16.mxu0 0
        %1323 = vmatpush1.bf16.msra.mxu0 0
        %1324 = vmatprep.subr.bf16.mxu0 0
        %1325 = vmatpush1.bf16.msra.mxu0 0
        %1326 = vmatprep.mubr.bf16.mxu0 0
        %1327 = vmatmul.mubr.bf16.gmra.mrb[0].mxu0 %v1289
        %v1328 = vpop.f32.mrb[0].mxu0
        %v1329 = vadd.f32 0.0, %v1328
        %v1330 = vpop.f32.mrb[0].mxu0
        %v1331 = vpop.f32.mrb[0].mxu0
        %v1332 = vpop.f32.mrb[0].mxu0
        %1333 = vdwg.mxu0
        %1334 = vrot.lane.b32.xlu0 %v554, 100
        %v1335 = vpop.permute.xlu0 %1334
        %1336 = vrot.lane.b32.xlu0 %v555, 100
        %v1337 = vpop.permute.xlu0 %1336
        %v1339 = vsel %vm557, %v1335, 0
        %v1342 = vsel %vm557, %v1337, 0
        %1344 = vmatprep.subr.bf16.mxu0 0
        %1345 = vmatpush1.bf16.xpose.msra.mxu0 %v1342
        %1346 = vmatprep.subr.bf16.mxu0 0
        %1347 = vmatpush1.bf16.xpose.msra.mxu0 0
        %1348 = vmatprep.subr.bf16.mxu0 0
        %1349 = vmatpush1.bf16.xpose.msra.mxu0 0
        %1350 = vmatprep.subr.bf16.mxu0 0
        %1351 = vmatpush1.bf16.xpose.msra.mxu0 0
        %1352 = vmatprep.subr.bf16.mxu0 0
        %1353 = vmatpush1.bf16.xpose.msra.mxu0 0
        %1354 = vmatprep.subr.bf16.mxu0 0
        %1355 = vmatpush1.bf16.xpose.msra.mxu0 0
        %1356 = vmatprep.subr.bf16.mxu0 0
        %1357 = vmatpush1.bf16.xpose.msra.mxu0 0
        %1358 = vmatprep.subr.bf16.mxu0 0
        %1359 = vmatpush1.bf16.xpose.msra.mxu0 0
        %1360 = vmatprep.subr.bf16.mxu0 0
        %1361 = vmatpush1.bf16.xpose.msra.mxu0 0
        %1362 = vmatprep.subr.bf16.mxu0 0
        %1363 = vmatpush1.bf16.xpose.msra.mxu0 0
        %1364 = vmatprep.subr.bf16.mxu0 0
        %1365 = vmatpush1.bf16.xpose.msra.mxu0 0
        %1366 = vmatprep.subr.bf16.mxu0 0
        %1367 = vmatpush1.bf16.xpose.msra.mxu0 0
        %1368 = vmatprep.subr.bf16.mxu0 0
        %1369 = vmatpush1.bf16.xpose.msra.mxu0 0
        %1370 = vmatprep.subr.bf16.mxu0 0
        %1371 = vmatpush1.bf16.xpose.msra.mxu0 0
        %1372 = vmatprep.subr.bf16.mxu0 0
        %1373 = vmatpush1.bf16.xpose.msra.mxu0 0
        %1374 = vmatprep.subr.bf16.mxu0 0
        %1375 = vmatpush1.bf16.xpose.msra.mxu0 0
        %1376 = vmatprep.mubr.bf16.mxu0 0
        %1377 = vmatmul.mubr.bf16.gmra.mrb[0].mxu0 %v1339
        %v1378 = vpop.f32.mrb[0].mxu0
        %v1379 = vadd.f32 0.0, %v1378
        %v1380 = vpop.f32.mrb[0].mxu0
        %v1381 = vpop.f32.mrb[0].mxu0
        %v1382 = vpop.f32.mrb[0].mxu0
        %1383 = vdwg.mxu0
        %v1384 = vmul.f32 %v1379, 0.5
        %v1385 = vsel %vm605, %v1384, -inf
        %1386 = vmax.xlane.f32.xlu0 %v1385
        %v1387 = vpop.xlane.xlu0 %1386
        %v1388 = vsub.f32 %v1384, %v1387
        %v1389 = vmul.f32 %v1388, 1.442695
        %v1390 = vpow.pop %v1389
        %v1391 = vsel %vm605, %v1390, 0.0
        %1392 = vadd.xlane.f32.xlu0 %v1391
        %v1393 = vpop.xlane.xlu0 %1392
        %v1394 = vrcp.pop %v1393
        %v1395 = vmul.f32 %v1390, %v1394
        %v1396 = vpack.c.bf16 %v1395, %v1395
        %1397 = vrot.lane.b32.xlu0 %v556, 100
        %v1398 = vpop.permute.xlu0 %1397
        %v1400 = vsel %vm605, %v1396, 0
        %v1403 = vsel %vm621, %v1398, 0
        %1405 = vmatprep.subr.bf16.mxu0 0
        %1406 = vmatpush1.bf16.msra.mxu0 %v1403
        %1407 = vmatprep.subr.bf16.mxu0 0
        %1408 = vmatpush1.bf16.msra.mxu0 0
        %1409 = vmatprep.subr.bf16.mxu0 0
        %1410 = vmatpush1.bf16.msra.mxu0 0
        %1411 = vmatprep.subr.bf16.mxu0 0
        %1412 = vmatpush1.bf16.msra.mxu0 0
        %1413 = vmatprep.subr.bf16.mxu0 0
        %1414 = vmatpush1.bf16.msra.mxu0 0
        %1415 = vmatprep.subr.bf16.mxu0 0
        %1416 = vmatpush1.bf16.msra.mxu0 0
        %1417 = vmatprep.subr.bf16.mxu0 0
        %1418 = vmatpush1.bf16.msra.mxu0 0
        %1419 = vmatprep.subr.bf16.mxu0 0
        %1420 = vmatpush1.bf16.msra.mxu0 0
        %1421 = vmatprep.subr.bf16.mxu0 0
        %1422 = vmatpush1.bf16.msra.mxu0 0
        %1423 = vmatprep.subr.bf16.mxu0 0
        %1424 = vmatpush1.bf16.msra.mxu0 0
        %1425 = vmatprep.subr.bf16.mxu0 0
        %1426 = vmatpush1.bf16.msra.mxu0 0
        %1427 = vmatprep.subr.bf16.mxu0 0
        %1428 = vmatpush1.bf16.msra.mxu0 0
        %1429 = vmatprep.subr.bf16.mxu0 0
        %1430 = vmatpush1.bf16.msra.mxu0 0
        %1431 = vmatprep.subr.bf16.mxu0 0
        %1432 = vmatpush1.bf16.msra.mxu0 0
        %1433 = vmatprep.subr.bf16.mxu0 0
        %1434 = vmatpush1.bf16.msra.mxu0 0
        %1435 = vmatprep.subr.bf16.mxu0 0
        %1436 = vmatpush1.bf16.msra.mxu0 0
        %1437 = vmatprep.mubr.bf16.mxu0 0
        %1438 = vmatmul.mubr.bf16.gmra.mrb[0].mxu0 %v1400
        %v1439 = vpop.f32.mrb[0].mxu0
        %v1440 = vadd.f32 0.0, %v1439
        %v1441 = vpop.f32.mrb[0].mxu0
        %v1442 = vpop.f32.mrb[0].mxu0
        %v1443 = vpop.f32.mrb[0].mxu0
        %1444 = vdwg.mxu0
        %1446 = vrot.lane.b32.xlu0 %v774, 4
        %v1447 = vpop.permute.xlu0 %1446
        %1450 = vrot.lane.b32.xlu0 %v885, 8
        %v1451 = vpop.permute.xlu0 %1450
        %1454 = vrot.lane.b32.xlu0 %v996, 12
        %v1455 = vpop.permute.xlu0 %1454
        %1458 = vrot.lane.b32.xlu0 %v1107, 16
        %v1459 = vpop.permute.xlu0 %1458
        %1462 = vrot.lane.b32.xlu0 %v1218, 20
        %v1463 = vpop.permute.xlu0 %1462
        %1466 = vrot.lane.b32.xlu0 %v1329, 24
        %v1467 = vpop.permute.xlu0 %1466
        %1470 = vrot.lane.b32.xlu0 %v1440, 28
        %v1471 = vpop.permute.xlu0 %1470
        %v1473 = vsel %vm557, %v660, %v1447
        %v1474 = vsel %vm605, %v1473, %v1451
        %vm1475 = vcmask 97280
        %v1476 = vsel %vm1475, %v1474, %v1455
        %vm1477 = vcmask 130048
        %v1478 = vsel %vm1477, %v1476, %v1459
        %vm1479 = vcmask 162816
        %v1480 = vsel %vm1479, %v1478, %v1463
        %vm1481 = vcmask 195584
        %v1482 = vsel %vm1481, %v1480, %v1467
        %vm1483 = vcmask 228352
        %v1484 = vsel %vm1483, %v1482, %v1471
        %v1485 = vpack.c.bf16 %v1484, %v1484
        %v1486 = vld [vmem:[%s5] sm:$0xf]
        %v1487 = vld [vmem:[%s5 + $0x4] sm:$0xf]
        %v1488 = vld [vmem:[%s5 + $0x8] sm:$0xf]
        %v1489 = vld [vmem:[%s5 + $0xc] sm:$0xf]
        %v1490 = vld [vmem:[%s6] sm:$0x1]
        %v1492 = vlaneseq
        %v1493 = vshrl.u32 %v1492, 7
        %v1494 = vsub.s32 0, %v1493
        %v1495 = vrot.slane %v1490, %v1494
        %v1501 = vunpack.c.l.b16 %v1486
        %v1502 = vunpack.c.l.b16 %v1487
        %v1503 = vunpack.c.l.b16 %v1488
        %v1504 = vunpack.c.l.b16 %v1489
        %v1505 = vpack.c.b16 %v1502, %v1501
        %v1506 = vpack.c.b16 %v1504, %v1503
        %v1510 = vsel %vm395, %v1485, 0
        %1512 = vmatprep.subr.bf16.mxu0 0
        %1513 = vmatpush1.bf16.msra.mxu0 %v1505
        %1514 = vmatprep.subr.bf16.mxu0 0
        %1515 = vmatpush1.bf16.msra.mxu0 %v1506
        %1516 = vmatprep.subr.bf16.mxu0 0
        %1517 = vmatpush1.bf16.msra.mxu0 0
        %1518 = vmatprep.subr.bf16.mxu0 0
        %1519 = vmatpush1.bf16.msra.mxu0 0
        %1520 = vmatprep.subr.bf16.mxu0 0
        %1521 = vmatpush1.bf16.msra.mxu0 0
        %1522 = vmatprep.subr.bf16.mxu0 0
        %1523 = vmatpush1.bf16.msra.mxu0 0
        %1524 = vmatprep.subr.bf16.mxu0 0
        %1525 = vmatpush1.bf16.msra.mxu0 0
        %1526 = vmatprep.subr.bf16.mxu0 0
        %1527 = vmatpush1.bf16.msra.mxu0 0
        %1528 = vmatprep.subr.bf16.mxu0 0
        %1529 = vmatpush1.bf16.msra.mxu0 0
        %1530 = vmatprep.subr.bf16.mxu0 0
        %1531 = vmatpush1.bf16.msra.mxu0 0
        %1532 = vmatprep.subr.bf16.mxu0 0
        %1533 = vmatpush1.bf16.msra.mxu0 0
        %1534 = vmatprep.subr.bf16.mxu0 0
        %1535 = vmatpush1.bf16.msra.mxu0 0
        %1536 = vmatprep.subr.bf16.mxu0 0
        %1537 = vmatpush1.bf16.msra.mxu0 0
        %1538 = vmatprep.subr.bf16.mxu0 0
        %1539 = vmatpush1.bf16.msra.mxu0 0
        %1540 = vmatprep.subr.bf16.mxu0 0
        %1541 = vmatpush1.bf16.msra.mxu0 0
        %1542 = vmatprep.subr.bf16.mxu0 0
        %1543 = vmatpush1.bf16.msra.mxu0 0
        %1544 = vmatprep.mubr.bf16.mxu0 0
        %1545 = vmatmul.mubr.bf16.gmra.mrb[0].mxu0 %v1510
        %v1546 = vpop.f32.mrb[0].mxu0
        %v1547 = vadd.f32 %v1495, %v1546
        %v1548 = vpop.f32.mrb[0].mxu0
        %v1549 = vpop.f32.mrb[0].mxu0
        %v1550 = vpop.f32.mrb[0].mxu0
        %1551 = vdwg.mxu0
        %1552 = vst.msk [vmem:[%s373] sm:$0xff] %vm395, %v1547
        %s1553 = sand.u32 %s193, 1
        %s1554 = scalar_lea.sflag [#allocation4], %s1553
        %s1555 = sand.u32 %s193, 1
        %s1556 = smul.addr %s1555, 8
        %s1557 = scalar_lea.vmem [#allocation11], %s1556
        // Predicated region
        $region69: #{tpu_custom_call.1} parent=47 // pred_check
          %p1558 = pneg %p203
        $region70: #{tpu_custom_call.1} parent=47 // pred_check_branch
          %1560 = sbr.rel (%p1558) target = $region72
        $region71: #{tpu_custom_call.1} parent=47 // pred_region
          %s1562 = ssub.s32 128, 128
          %1563 = vsyncadd %s1554, %s1562
          %s1564 = smul.addr %s28, 128
          %s1565 = scalar_lea.hbm %s7, %s1564
          %s1567 = sshll.u32 %s1557, 4
          %s1568 = int_to_ptr.vmem [resolvable:$true] %s1567
          %1570 = dma.vmem_to_hbm [thread:$0]  %s1568, 128, %s1565, %s1554
        $region72: #{tpu_custom_call.1} parent=47 // pred_fallthru
          _
      $region48: #{tpu_custom_call.1} parent=5 // pred_fallthru
        _
      %p1571 = scmp.le.s32.totalorder 2, %s23
      // Predicated region
      $region73: #{tpu_custom_call.1} parent=5 // pred_check
        %p1572 = pneg %p1571
      $region74: #{tpu_custom_call.1} parent=5 // pred_check_branch
        %1574 = sbr.rel (%p1572) target = $region76
      $region75: #{tpu_custom_call.1} parent=5 // pred_region
        %s1575 = ssub.s32 %s23, 2
        // Predicated region
        $region77: #{tpu_custom_call.1} parent=75 // pred_check
          %p1576 = pneg %p209
        $region78: #{tpu_custom_call.1} parent=75 // pred_check_branch
          %1578 = sbr.rel (%p1576) target = $region80
        $region79: #{tpu_custom_call.1} parent=75 // pred_region
          %s1579 = sand.u32 %s194, 1
          %s1580 = scalar_lea.sflag [#allocation4], %s1579
          %s1581 = sand.u32 %s194, 1
          %s1582 = smul.addr %s1581, 8
          %s1583 = scalar_lea.vmem [#allocation11], %s1582
          %1584 = dma.done %s1580, 128
        $region80: #{tpu_custom_call.1} parent=75 // pred_fallthru
          _
      $region76: #{tpu_custom_call.1} parent=5 // pred_fallthru
        _
    $region6: #{tpu_custom_call.1} parent=1 // loop_footer
      %s27 = sadd.s32 1, %s23
    $region7: #{tpu_custom_call.1} parent=1 // loop_footer_branch
      %22 = sbr.rel target = $region3
    $region8: #{tpu_custom_call.1} parent=1 // loop_exit
      _
    %1585 = vsyncpa [#allocation3], 1
    %s1586 = scalar_lea.sflag [#allocation3], 1
    %1587 = vsyncpa %s1586, 1
    %1588 = vsyncpa [#allocation6], 1
    %s1589 = scalar_lea.sflag [#allocation6], 1
    %1590 = vsyncpa %s1589, 1
    %1591 = vsyncpa [#allocation9], 1
    %1592 = vsyncpa [#allocation4], 1
    %s1593 = scalar_lea.sflag [#allocation4], 1
    %1594 = vsyncpa %s1593, 1

</llo_original>
